<compile_context>
chip_gen: v5e
topology: v5e:2x2
jax: 0.10.0
libtpu: 0.0.40
codegen_flags: <defaults>
</compile_context>

<pallas_src>
import math

import jax
import jax.numpy as jnp
import numpy as np
from jax.experimental import pallas as pl
from jax.experimental.pallas import tpu as pltpu


PARAMS = dict(
    input_size=64, num_classes=10,
    conv1_input_channel=1,  conv1_output_channel=8,  kernel_size1=3, stride1=1, padding1=1, drop_rate1=0.1, pool1=2,
    conv2_input_channel=8,  conv2_output_channel=16, kernel_size2=3, stride2=1, padding2=1, drop_rate2=0.1, pool2=2,
    conv3_input_channel=16, conv3_output_channel=32, kernel_size3=3, stride3=1, padding3=1, drop_rate3=0.1, pool3=2,
    conv4_input_channel=32, conv4_output_channel=32, kernel_size4=3, stride4=1, padding4=1, drop_rate4=0.1, pool4=2,
)
BN_EPS = 1e-5


# ----------------------------------------------------------------------------
# Static per-layer configuration
# ----------------------------------------------------------------------------
def _layer_cfgs(p):
    cfgs = []
    L = p['input_size']
    for i in (1, 2, 3, 4):
        cin = p[f'conv{i}_input_channel']
        cout = p[f'conv{i}_output_channel']
        K = p[f'kernel_size{i}']
        stride = p[f'stride{i}']
        pad = p[f'padding{i}']
        pool = p[f'pool{i}']
        assert stride == 1, "fused kernel implemented for stride=1 convolutions"
        G = L + 2 * pad                  # per-sample segment width (with halos)
        L_out = G - K + 1                # conv output length (stride 1)
        L_pool = L_out // pool           # MaxPool1d floor semantics
        cfgs.append(dict(cin=cin, cout=cout, K=K, pad=pad, pool=pool,
                         L_in=L, G=G, L_out=L_out, L_pool=L_pool))
        L = L_pool
    return cfgs


# ----------------------------------------------------------------------------
# Host-side precomputed per-chunk 0/1 selection matrices.
# Each covers r samples only, so their size is O(r^2), independent of NB.
# ----------------------------------------------------------------------------
def _sel_np(r, G_in, L_out, pool, G_out, pad_out):
    """window-maxed conv layout (r samples) -> next layer's zero-haloed layout."""
    L_pool = L_out // pool
    M = np.zeros((r * G_in, r * G_out), np.float32)
    for s in range(r):
        for m in range(L_pool):
            M[s * G_in + pool * m, s * G_out + pad_out + m] = 1.0
    return M


def _sel_final_np(r, G_in, L_out, pool):
    """window-maxed layer-4 layout (r samples) -> pooled feats, col = m*r + s."""
    L_pool = L_out // pool
    M = np.zeros((r * G_in, L_pool * r), np.float32)
    for s in range(r):
        for m in range(L_pool):
            M[s * G_in + pool * m, m * r + s] = 1.0
    return M


# ----------------------------------------------------------------------------
# Per-layer parameter prep (BN folding into conv weights when gamma > 0)
# ----------------------------------------------------------------------------
def _can_fold(scale):
    try:
        return bool(np.all(np.asarray(scale) > 0.0))
    except Exception:            # traced (e.g. under jit) -> don't fold
        return False


def _prep_layer(w, b, scale, shift, fold):
    cout, cin, K = w.shape
    # Tap-stacked weight: column k*cin + c holds w[:, c, k] (matches the
    # in-kernel sublane stacking order of the K shifted activation slices).
    wst = jnp.transpose(w, (0, 2, 1)).reshape(cout, K * cin).astype(jnp.float32)
    if fold:
        # relu(conv+b)*s + t == max(conv*s + (b*s + t), t)   (valid since s > 0)
        wst = wst * scale.reshape(cout, 1).astype(jnp.float32)
        add = (b * scale + shift).reshape(cout, 1).astype(jnp.float32)
        flr = shift.reshape(cout, 1).astype(jnp.float32)
        return (wst, add, flr)
    return (wst,
            b.reshape(cout, 1).astype(jnp.float32),
            scale.reshape(cout, 1).astype(jnp.float32),
            shift.reshape(cout, 1).astype(jnp.float32))


# ----------------------------------------------------------------------------
# Fused kernel builder
# ----------------------------------------------------------------------------
def _build_kernel(cfgs, NB, r, L5, fold):
    n_per_layer = 3 if fold else 4
    n_layers = len(cfgs)
    n_chunks = NB // r

    def kernel(*refs):
        x_ref = refs[0]
        pos = 1
        layer_refs = []
        for _ in range(n_layers):
            layer_refs.append(refs[pos:pos + n_per_layer])
            pos += n_per_layer
        sel_refs = refs[pos:pos + n_layers]; pos += n_layers
        wh_ref = refs[pos]; pos += 1
        bh_ref = refs[pos]; pos += 1
        o_ref = refs[pos]

        # Layer-1 activation: per-sample zero-haloed segments, already laid
        # out lane-dense by the host-side pad/reshape.
        a = x_ref[0]                               # (C_in1, NB*G1) f32

        for li, cfg in enumerate(cfgs):
            cin, cout = cfg['cin'], cfg['cout']
            K, pool, G = cfg['K'], cfg['pool'], cfg['G']
            W = NB * G
            Wc = W - (K - 1)                       # truncated conv-output width
            wst = layer_refs[li][0][...]           # (cout, K*cin)

            # Conv1d (stride=1).  Layers with sublane-aligned C_in use ONE
            # tap-fused matmul on the sublane-stacked shifted slices; layer 1
            # (C_in=1) keeps the per-tap accumulation path.
            if cin % 8 == 0:
                stk = jnp.concatenate([a[:, k:k + Wc] for k in range(K)],
                                      axis=0)       # (K*cin, Wc)
                y = jnp.dot(wst, stk, preferred_element_type=jnp.float32)
            else:
                y = jnp.dot(wst[:, 0:cin], a[:, 0:Wc],
                            preferred_element_type=jnp.float32)
                for k in range(1, K):
                    y = y + jnp.dot(wst[:, k * cin:(k + 1) * cin],
                                    a[:, k:k + Wc],
                                    preferred_element_type=jnp.float32)

            # ReLU + (Dropout=id) + eval-mode BatchNorm, folded when gamma > 0.
            if fold:
                add_ref, flr_ref = layer_refs[li][1], layer_refs[li][2]
                z = jnp.maximum(y + add_ref[...], flr_ref[...])
            else:
                b_ref, sc_ref, sh_ref = layer_refs[li][1:4]
                z = jnp.maximum(y + b_ref[...], 0.0) * sc_ref[...] + sh_ref[...]

            # MaxPool1d(pool): window max via shifted slices (no downsample yet),
            # padded back to width W so the chunk slices below stay in range.
            wp = Wc - (pool - 1)
            w2 = z[:, 0:wp]
            for psh in range(1, pool):
                w2 = jnp.maximum(w2, z[:, psh:psh + wp])
            w2 = jnp.concatenate(
                [w2, jnp.zeros((cout, W - wp), jnp.float32)], axis=1)  # (cout, W)

            # Downsample-by-pool + relayout into the next layer's zero-haloed
            # segments via per-chunk (r samples) exact 0/1 selection matmuls.
            sel = sel_refs[li][...]
            CG = r * G
            outs = [jnp.dot(w2[:, q * CG:(q + 1) * CG], sel,
                            preferred_element_type=jnp.float32)
                    for q in range(n_chunks)]

            if li + 1 < n_layers:
                a = outs[0] if n_chunks == 1 else jnp.concatenate(outs, axis=1)
            else:
                # Last conv block: each chunk output is (C4, L5*r), position
                # major (col = m*r + s).  Stack the L5 position slices along
                # sublanes -> (C4*L5, r) per chunk, concat chunks along lanes
                # -> (C4*L5, NB), then ONE 128-deep matmul for the Linear head
                # with logits emitted in (ncls, NB) layout (lane = batch).
                feat_chunks = []
                for co in outs:
                    cols = [co[:, m * r:(m + 1) * r] for m in range(L5)]
                    feat_chunks.append(
                        cols[0] if L5 == 1 else jnp.concatenate(cols, axis=0))
                feats = (feat_chunks[0] if n_chunks == 1
                         else jnp.concatenate(feat_chunks, axis=1))
                logits = jnp.dot(wh_ref[...], feats,
                                 preferred_element_type=jnp.float32) + bh_ref[...]
                o_ref[0] = logits.astype(o_ref.dtype)

    return kernel


# ----------------------------------------------------------------------------
# Fused forward pass (one pallas_call for the whole network)
# ----------------------------------------------------------------------------
def cnn_norm_forward(x, wts, p=PARAMS, batch_block=None):
    cfgs = _layer_cfgs(p)
    ncls = p['num_classes']
    N = x.shape[0]
    cin1, L1, G1, pad1 = (cfgs[0]['cin'], cfgs[0]['L_in'],
                          cfgs[0]['G'], cfgs[0]['pad'])
    assert x.shape[1] == cin1 and x.shape[2] == L1

    out_param1 = math.ceil(math.ceil(math.ceil(math.ceil(
        p['input_size'] / p['pool1']) / p['pool2']) / p['pool3']) / p['pool4'])
    L5 = cfgs[-1]['L_pool']
    C4 = cfgs[-1]['cout']
    assert L5 == out_param1, "odd intermediate lengths not supported"

    # Batch block: up to 128 samples packed along lanes per grid step, while
    # keeping >=2 grid blocks whenever N >= 2 (v7x megacore).  r = samples per
    # selection chunk (constants are O(r^2), independent of NB).
    if batch_block is None:
        NB = min(128, max(1, -(-N // 2)))
        if NB > 8:
            NB = min(128, 8 * (-(-NB // 8)))
    else:
        NB = int(batch_block)
    if NB <= 8:
        r = NB
    elif NB % 8 == 0:
        r = 8
    else:
        r = math.gcd(NB, 8)
    n_blocks = -(-N // NB)
    N_pad = n_blocks * NB

    # Layer-1 zero-haloed segment layout, built host side (one tiny pad +
    # reshape) so the kernel input is ONE lane-dense (cin, NB*G1) slab / step.
    xs = x.astype(jnp.float32)
    if N_pad != N:
        xs = jnp.concatenate(
            [xs, jnp.zeros((N_pad - N,) + xs.shape[1:], jnp.float32)], axis=0)
    xs = jnp.pad(xs, ((0, 0), (0, 0), (pad1, G1 - L1 - pad1)))
    xs = jnp.transpose(xs, (1, 0, 2)).reshape(cin1, n_blocks, NB * G1)
    xs = jnp.transpose(xs, (1, 0, 2))                  # (n_blocks, cin, NB*G1)

    fold = all(_can_fold(wts[f'bn_scale{i}']) for i in (1, 2, 3, 4))

    def const_spec(a):
        return pl.BlockSpec(a.shape, lambda b, nd=a.ndim: (0,) * nd)

    inputs = [xs]
    in_specs = [pl.BlockSpec((1, cin1, NB * G1), lambda b: (b, 0, 0))]

    for i, cfg in zip((1, 2, 3, 4), cfgs):
        for arr in _prep_layer(wts[f'w{i}'], wts[f'b{i}'],
                               wts[f'bn_scale{i}'], wts[f'bn_shift{i}'], fold):
            inputs.append(arr)
            in_specs.append(const_spec(arr))

    for li, cfg in enumerate(cfgs):
        if li + 1 < len(cfgs):
            nxt = cfgs[li + 1]
            sel = _sel_np(r, cfg['G'], cfg['L_out'], cfg['pool'],
                          nxt['G'], nxt['pad'])
        else:
            sel = _sel_final_np(r, cfg['G'], cfg['L_out'], cfg['pool'])
        sel = jnp.asarray(sel)
        inputs.append(sel)
        in_specs.append(const_spec(sel))

    # Linear head: weight columns regrouped so that stacked-feature row
    # m*C4 + c matches PyTorch's x.view(N, -1) order (feature index c*L5 + m).
    w_head = wts['w_out'].astype(jnp.float32).reshape(ncls, C4, L5)
    w_head = jnp.transpose(w_head, (0, 2, 1)).reshape(ncls, L5 * C4)
    b_head = wts['b_out'].reshape(ncls, 1).astype(jnp.float32)
    inputs += [w_head, b_head]
    in_specs += [const_spec(w_head), const_spec(b_head)]

    kernel = _build_kernel(cfgs, NB, r, L5, fold)

    out = pl.pallas_call(
        kernel,
        out_shape=jax.ShapeDtypeStruct((n_blocks, ncls, NB), jnp.float32),
        grid_spec=pltpu.PrefetchScalarGridSpec(
            num_scalar_prefetch=0,
            grid=(n_blocks,),
            in_specs=in_specs,
            out_specs=pl.BlockSpec((1, ncls, NB), lambda b: (b, 0, 0)),
        ),
        compiler_params=pltpu.CompilerParams(
            dimension_semantics=("parallel",)),
    )(*inputs)

    logits = jnp.transpose(out, (0, 2, 1)).reshape(N_pad, ncls)
    return logits[:N]


# ----------------------------------------------------------------------------
# Deterministic parameter setup (matches nn.Module __init__ shapes)
# ----------------------------------------------------------------------------
def init_weights(key, p):
    weights = {}
    for i in (1, 2, 3, 4):
        cin, cout, k = (p[f'conv{i}_input_channel'],
                        p[f'conv{i}_output_channel'], p[f'kernel_size{i}'])
        key, kw, kb, kg, kbt, km, kv = jax.random.split(key, 7)
        weights[f'w{i}'] = 0.1 * jax.random.normal(kw, (cout, cin, k), jnp.float32)
        weights[f'b{i}'] = 0.1 * jax.random.normal(kb, (cout,), jnp.float32)
        gamma = 0.5 + jax.random.uniform(kg, (cout,), jnp.float32)
        beta = 0.1 * jax.random.normal(kbt, (cout,), jnp.float32)
        rmean = 0.1 * jax.random.normal(km, (cout,), jnp.float32)
        rvar = 0.5 + jax.random.uniform(kv, (cout,), jnp.float32)
        scale = gamma / jnp.sqrt(rvar + BN_EPS)
        weights[f'bn_scale{i}'] = scale
        weights[f'bn_shift{i}'] = beta - rmean * scale
    out_param1 = math.ceil(math.ceil(math.ceil(math.ceil(
        p['input_size'] / p['pool1']) / p['pool2']) / p['pool3']) / p['pool4'])
    feat = p['conv4_output_channel'] * out_param1
    key, kw, kb = jax.random.split(key, 3)
    weights['w_out'] = 0.1 * jax.random.normal(kw, (p['num_classes'], feat), jnp.float32)
    weights['b_out'] = 0.1 * jax.random.normal(kb, (p['num_classes'],), jnp.float32)
    return weights


# ----------------------------------------------------------------------------
# Pure-JAX reference (same eval-mode semantics) for correctness checks
# ----------------------------------------------------------------------------
def ref_block(x, w, b, scale, shift, padding, pool):
    xp = jnp.pad(x, ((0, 0), (0, 0), (padding, padding)))
    y = jax.lax.conv_general_dilated(xp, w, (1,), 'VALID',
                                     dimension_numbers=('NCH', 'OIH', 'NCH'))
    y = y + b[None, :, None]
    y = jnp.maximum(y, 0.0)
    y = y * scale[None, :, None] + shift[None, :, None]
    N, C, L = y.shape
    Lp = L // pool
    return y[:, :, :Lp * pool].reshape(N, C, Lp, pool).max(-1)


def ref_forward(x, wts, p=PARAMS):
    for i in (1, 2, 3, 4):
        x = ref_block(x, wts[f'w{i}'], wts[f'b{i}'],
                      wts[f'bn_scale{i}'], wts[f'bn_shift{i}'],
                      p[f'padding{i}'], p[f'pool{i}'])
    x = x.reshape(x.shape[0], -1)
    return x @ wts['w_out'].T + wts['b_out'][None, :]


if __name__ == "__main__":
    key = jax.random.PRNGKey(0)
    key, kx = jax.random.split(key)
    x = jax.random.normal(kx, (2, PARAMS['conv1_input_channel'],
                               PARAMS['input_size']), jnp.float32)
    wts = init_weights(key, PARAMS)

    # Tiny batch: NB=1, two grid blocks.
    logits = jax.block_until_ready(cnn_norm_forward(x, wts))
    assert logits.shape == (2, PARAMS['num_classes'])
    ref = jax.block_until_ready(ref_forward(x, wts))
    np.testing.assert_allclose(np.asarray(logits), np.asarray(ref),
                               rtol=1e-4, atol=1e-4)

    # Batch-padding path (N=5 -> NB=3, single chunk, 2 blocks, 1 padded sample).
    key, kx2 = jax.random.split(key)
    x2 = jax.random.normal(kx2, (5, PARAMS['conv1_input_channel'],
                                 PARAMS['input_size']), jnp.float32)
    logits2 = jax.block_until_ready(cnn_norm_forward(x2, wts))
    ref2 = jax.block_until_ready(ref_forward(x2, wts))
    np.testing.assert_allclose(np.asarray(logits2), np.asarray(ref2),
                               rtol=1e-4, atol=1e-4)

    # Full lane-dense path: N=256 -> NB=128 samples/step, r=8-sample selection
    # chunks, 2 grid blocks (exercises the production configuration).
    key, kx3 = jax.random.split(key)
    x3 = jax.random.normal(kx3, (256, PARAMS['conv1_input_channel'],
                                 PARAMS['input_size']), jnp.float32)
    logits3 = jax.block_until_ready(cnn_norm_forward(x3, wts))
    ref3 = jax.block_until_ready(ref_forward(x3, wts))
    np.testing.assert_allclose(np.asarray(logits3), np.asarray(ref3),
                               rtol=1e-4, atol=1e-4)

    print("KERNEL_OK")
</pallas_src>

<mosaic_0001>
module attributes {stable_mosaic.version = 11 : i64} {
  func.func @kernel(%arg0: i32, %arg1: memref<1x1x66xf32, #tpu.memory_space<vmem>>, %arg2: memref<8x3xf32, #tpu.memory_space<vmem>>, %arg3: memref<8x1xf32, #tpu.memory_space<vmem>>, %arg4: memref<8x1xf32, #tpu.memory_space<vmem>>, %arg5: memref<16x24xf32, #tpu.memory_space<vmem>>, %arg6: memref<16x1xf32, #tpu.memory_space<vmem>>, %arg7: memref<16x1xf32, #tpu.memory_space<vmem>>, %arg8: memref<32x48xf32, #tpu.memory_space<vmem>>, %arg9: memref<32x1xf32, #tpu.memory_space<vmem>>, %arg10: memref<32x1xf32, #tpu.memory_space<vmem>>, %arg11: memref<32x96xf32, #tpu.memory_space<vmem>>, %arg12: memref<32x1xf32, #tpu.memory_space<vmem>>, %arg13: memref<32x1xf32, #tpu.memory_space<vmem>>, %arg14: memref<66x34xf32, #tpu.memory_space<vmem>>, %arg15: memref<34x18xf32, #tpu.memory_space<vmem>>, %arg16: memref<18x10xf32, #tpu.memory_space<vmem>>, %arg17: memref<10x4xf32, #tpu.memory_space<vmem>>, %arg18: memref<10x128xf32, #tpu.memory_space<vmem>>, %arg19: memref<10x1xf32, #tpu.memory_space<vmem>>, %arg20: memref<1x10x1xf32, #tpu.memory_space<vmem>>) attributes {dimension_semantics = [#tpu.dimension_semantics<parallel>], iteration_bounds = array<i64: 2>, scalar_prefetch = 0 : i64, scratch_operands = 0 : i64, tpu.core_type = #tpu.core_type<tc>, window_params = [{transform_indices = @transform_0, window_bounds = array<i64: 1, 1, 66>}, {pipeline_mode = #tpu.pipeline_mode<synchronous>, transform_indices = @transform_1, window_bounds = array<i64: 8, 3>}, {pipeline_mode = #tpu.pipeline_mode<synchronous>, transform_indices = @transform_2, window_bounds = array<i64: 8, 1>}, {pipeline_mode = #tpu.pipeline_mode<synchronous>, transform_indices = @transform_3, window_bounds = array<i64: 8, 1>}, {pipeline_mode = #tpu.pipeline_mode<synchronous>, transform_indices = @transform_4, window_bounds = array<i64: 16, 24>}, {pipeline_mode = #tpu.pipeline_mode<synchronous>, transform_indices = @transform_5, window_bounds = array<i64: 16, 1>}, {pipeline_mode = #tpu.pipeline_mode<synchronous>, transform_indices = @transform_6, window_bounds = array<i64: 16, 1>}, {pipeline_mode = #tpu.pipeline_mode<synchronous>, transform_indices = @transform_7, window_bounds = array<i64: 32, 48>}, {pipeline_mode = #tpu.pipeline_mode<synchronous>, transform_indices = @transform_8, window_bounds = array<i64: 32, 1>}, {pipeline_mode = #tpu.pipeline_mode<synchronous>, transform_indices = @transform_9, window_bounds = array<i64: 32, 1>}, {pipeline_mode = #tpu.pipeline_mode<synchronous>, transform_indices = @transform_10, window_bounds = array<i64: 32, 96>}, {pipeline_mode = #tpu.pipeline_mode<synchronous>, transform_indices = @transform_11, window_bounds = array<i64: 32, 1>}, {pipeline_mode = #tpu.pipeline_mode<synchronous>, transform_indices = @transform_12, window_bounds = array<i64: 32, 1>}, {pipeline_mode = #tpu.pipeline_mode<synchronous>, transform_indices = @transform_13, window_bounds = array<i64: 66, 34>}, {pipeline_mode = #tpu.pipeline_mode<synchronous>, transform_indices = @transform_14, window_bounds = array<i64: 34, 18>}, {pipeline_mode = #tpu.pipeline_mode<synchronous>, transform_indices = @transform_15, window_bounds = array<i64: 18, 10>}, {pipeline_mode = #tpu.pipeline_mode<synchronous>, transform_indices = @transform_16, window_bounds = array<i64: 10, 4>}, {pipeline_mode = #tpu.pipeline_mode<synchronous>, transform_indices = @transform_17, window_bounds = array<i64: 10, 128>}, {pipeline_mode = #tpu.pipeline_mode<synchronous>, transform_indices = @transform_18, window_bounds = array<i64: 10, 1>}, {transform_indices = @transform_19, window_bounds = array<i64: 1, 10, 1>}]} {
    %c0 = arith.constant 0 : index
    %c0_0 = arith.constant 0 : index
    %c0_1 = arith.constant 0 : index
    %0 = vector.load %arg1[%c0, %c0_0, %c0_1] : memref<1x1x66xf32, #tpu.memory_space<vmem>>, vector<1x1x66xf32>
    %1 = vector.shape_cast %0 : vector<1x1x66xf32> to vector<1x66xf32>
    %c0_2 = arith.constant 0 : index
    %c0_3 = arith.constant 0 : index
    %2 = vector.load %arg2[%c0_2, %c0_3] : memref<8x3xf32, #tpu.memory_space<vmem>>, vector<8x3xf32>
    %3 = vector.extract_strided_slice %2 {offsets = [0, 0], sizes = [8, 1], strides = [1, 1]} : vector<8x3xf32> to vector<8x1xf32>
    %4 = vector.extract_strided_slice %1 {offsets = [0, 0], sizes = [1, 64], strides = [1, 1]} : vector<1x66xf32> to vector<1x64xf32>
    %cst = arith.constant dense<0.000000e+00> : vector<8x64xf32>
    %5 = tpu.matmul %3, %4, %cst {dimension_numbers = #tpu.dot_dimension_numbers<[1], [0], [0], [1], [0, 0, 1, 1], [], []>} : vector<8x1xf32>, vector<1x64xf32>, vector<8x64xf32> -> vector<8x64xf32>
    %6 = vector.extract_strided_slice %2 {offsets = [0, 1], sizes = [8, 1], strides = [1, 1]} : vector<8x3xf32> to vector<8x1xf32>
    %7 = vector.extract_strided_slice %1 {offsets = [0, 1], sizes = [1, 64], strides = [1, 1]} : vector<1x66xf32> to vector<1x64xf32>
    %cst_4 = arith.constant dense<0.000000e+00> : vector<8x64xf32>
    %8 = tpu.matmul %6, %7, %cst_4 {dimension_numbers = #tpu.dot_dimension_numbers<[1], [0], [0], [1], [0, 0, 1, 1], [], []>} : vector<8x1xf32>, vector<1x64xf32>, vector<8x64xf32> -> vector<8x64xf32>
    %9 = arith.addf %5, %8 : vector<8x64xf32>
    %10 = vector.extract_strided_slice %2 {offsets = [0, 2], sizes = [8, 1], strides = [1, 1]} : vector<8x3xf32> to vector<8x1xf32>
    %11 = vector.extract_strided_slice %1 {offsets = [0, 2], sizes = [1, 64], strides = [1, 1]} : vector<1x66xf32> to vector<1x64xf32>
    %cst_5 = arith.constant dense<0.000000e+00> : vector<8x64xf32>
    %12 = tpu.matmul %10, %11, %cst_5 {dimension_numbers = #tpu.dot_dimension_numbers<[1], [0], [0], [1], [0, 0, 1, 1], [], []>} : vector<8x1xf32>, vector<1x64xf32>, vector<8x64xf32> -> vector<8x64xf32>
    %13 = arith.addf %9, %12 : vector<8x64xf32>
    %c0_6 = arith.constant 0 : index
    %c0_7 = arith.constant 0 : index
    %14 = vector.load %arg3[%c0_6, %c0_7] : memref<8x1xf32, #tpu.memory_space<vmem>>, vector<8x1xf32>
    %15 = vector.broadcast %14 : vector<8x1xf32> to vector<8x64xf32>
    %16 = arith.addf %13, %15 : vector<8x64xf32>
    %c0_8 = arith.constant 0 : index
    %c0_9 = arith.constant 0 : index
    %17 = vector.load %arg4[%c0_8, %c0_9] : memref<8x1xf32, #tpu.memory_space<vmem>>, vector<8x1xf32>
    %18 = vector.broadcast %17 : vector<8x1xf32> to vector<8x64xf32>
    %19 = arith.maximumf %16, %18 : vector<8x64xf32>
    %20 = vector.extract_strided_slice %19 {offsets = [0, 0], sizes = [8, 63], strides = [1, 1]} : vector<8x64xf32> to vector<8x63xf32>
    %21 = vector.extract_strided_slice %19 {offsets = [0, 1], sizes = [8, 63], strides = [1, 1]} : vector<8x64xf32> to vector<8x63xf32>
    %22 = arith.maximumf %20, %21 : vector<8x63xf32>
    %cst_10 = arith.constant 0.000000e+00 : f32
    %23 = vector.broadcast %cst_10 : f32 to vector<8x3xf32>
    %24 = tpu.concatenate %22, %23 in 1 : vector<8x63xf32>, vector<8x3xf32> -> vector<8x66xf32>
    %c0_11 = arith.constant 0 : index
    %c0_12 = arith.constant 0 : index
    %25 = vector.load %arg14[%c0_11, %c0_12] : memref<66x34xf32, #tpu.memory_space<vmem>>, vector<66x34xf32>
    %cst_13 = arith.constant dense<0.000000e+00> : vector<8x34xf32>
    %26 = tpu.matmul %24, %25, %cst_13 {dimension_numbers = #tpu.dot_dimension_numbers<[1], [0], [0], [1], [0, 0, 1, 1], [], []>} : vector<8x66xf32>, vector<66x34xf32>, vector<8x34xf32> -> vector<8x34xf32>
    %c0_14 = arith.constant 0 : index
    %c0_15 = arith.constant 0 : index
    %27 = vector.load %arg5[%c0_14, %c0_15] : memref<16x24xf32, #tpu.memory_space<vmem>>, vector<16x24xf32>
    %28 = vector.extract_strided_slice %26 {offsets = [0, 0], sizes = [8, 32], strides = [1, 1]} : vector<8x34xf32> to vector<8x32xf32>
    %29 = vector.extract_strided_slice %26 {offsets = [0, 1], sizes = [8, 32], strides = [1, 1]} : vector<8x34xf32> to vector<8x32xf32>
    %30 = vector.extract_strided_slice %26 {offsets = [0, 2], sizes = [8, 32], strides = [1, 1]} : vector<8x34xf32> to vector<8x32xf32>
    %31 = tpu.concatenate %28, %29, %30 in 0 : vector<8x32xf32>, vector<8x32xf32>, vector<8x32xf32> -> vector<24x32xf32>
    %cst_16 = arith.constant dense<0.000000e+00> : vector<16x32xf32>
    %32 = tpu.matmul %27, %31, %cst_16 {dimension_numbers = #tpu.dot_dimension_numbers<[1], [0], [0], [1], [0, 0, 1, 1], [], []>} : vector<16x24xf32>, vector<24x32xf32>, vector<16x32xf32> -> vector<16x32xf32>
    %c0_17 = arith.constant 0 : index
    %c0_18 = arith.constant 0 : index
    %33 = vector.load %arg6[%c0_17, %c0_18] : memref<16x1xf32, #tpu.memory_space<vmem>>, vector<16x1xf32>
    %34 = vector.broadcast %33 : vector<16x1xf32> to vector<16x32xf32>
    %35 = arith.addf %32, %34 : vector<16x32xf32>
    %c0_19 = arith.constant 0 : index
    %c0_20 = arith.constant 0 : index
    %36 = vector.load %arg7[%c0_19, %c0_20] : memref<16x1xf32, #tpu.memory_space<vmem>>, vector<16x1xf32>
    %37 = vector.broadcast %36 : vector<16x1xf32> to vector<16x32xf32>
    %38 = arith.maximumf %35, %37 : vector<16x32xf32>
    %39 = vector.extract_strided_slice %38 {offsets = [0, 0], sizes = [16, 31], strides = [1, 1]} : vector<16x32xf32> to vector<16x31xf32>
    %40 = vector.extract_strided_slice %38 {offsets = [0, 1], sizes = [16, 31], strides = [1, 1]} : vector<16x32xf32> to vector<16x31xf32>
    %41 = arith.maximumf %39, %40 : vector<16x31xf32>
    %cst_21 = arith.constant 0.000000e+00 : f32
    %42 = vector.broadcast %cst_21 : f32 to vector<16x3xf32>
    %43 = tpu.concatenate %41, %42 in 1 : vector<16x31xf32>, vector<16x3xf32> -> vector<16x34xf32>
    %c0_22 = arith.constant 0 : index
    %c0_23 = arith.constant 0 : index
    %44 = vector.load %arg15[%c0_22, %c0_23] : memref<34x18xf32, #tpu.memory_space<vmem>>, vector<34x18xf32>
    %cst_24 = arith.constant dense<0.000000e+00> : vector<16x18xf32>
    %45 = tpu.matmul %43, %44, %cst_24 {dimension_numbers = #tpu.dot_dimension_numbers<[1], [0], [0], [1], [0, 0, 1, 1], [], []>} : vector<16x34xf32>, vector<34x18xf32>, vector<16x18xf32> -> vector<16x18xf32>
    %c0_25 = arith.constant 0 : index
    %c0_26 = arith.constant 0 : index
    %46 = vector.load %arg8[%c0_25, %c0_26] : memref<32x48xf32, #tpu.memory_space<vmem>>, vector<32x48xf32>
    %47 = vector.extract_strided_slice %45 {offsets = [0, 0], sizes = [16, 16], strides = [1, 1]} : vector<16x18xf32> to vector<16x16xf32>
    %48 = vector.extract_strided_slice %45 {offsets = [0, 1], sizes = [16, 16], strides = [1, 1]} : vector<16x18xf32> to vector<16x16xf32>
    %49 = vector.extract_strided_slice %45 {offsets = [0, 2], sizes = [16, 16], strides = [1, 1]} : vector<16x18xf32> to vector<16x16xf32>
    %50 = tpu.concatenate %47, %48, %49 in 0 : vector<16x16xf32>, vector<16x16xf32>, vector<16x16xf32> -> vector<48x16xf32>
    %cst_27 = arith.constant dense<0.000000e+00> : vector<32x16xf32>
    %51 = tpu.matmul %46, %50, %cst_27 {dimension_numbers = #tpu.dot_dimension_numbers<[1], [0], [0], [1], [0, 0, 1, 1], [], []>} : vector<32x48xf32>, vector<48x16xf32>, vector<32x16xf32> -> vector<32x16xf32>
    %c0_28 = arith.constant 0 : index
    %c0_29 = arith.constant 0 : index
    %52 = vector.load %arg9[%c0_28, %c0_29] : memref<32x1xf32, #tpu.memory_space<vmem>>, vector<32x1xf32>
    %53 = vector.broadcast %52 : vector<32x1xf32> to vector<32x16xf32>
    %54 = arith.addf %51, %53 : vector<32x16xf32>
    %c0_30 = arith.constant 0 : index
    %c0_31 = arith.constant 0 : index
    %55 = vector.load %arg10[%c0_30, %c0_31] : memref<32x1xf32, #tpu.memory_space<vmem>>, vector<32x1xf32>
    %56 = vector.broadcast %55 : vector<32x1xf32> to vector<32x16xf32>
    %57 = arith.maximumf %54, %56 : vector<32x16xf32>
    %58 = vector.extract_strided_slice %57 {offsets = [0, 0], sizes = [32, 15], strides = [1, 1]} : vector<32x16xf32> to vector<32x15xf32>
    %59 = vector.extract_strided_slice %57 {offsets = [0, 1], sizes = [32, 15], strides = [1, 1]} : vector<32x16xf32> to vector<32x15xf32>
    %60 = arith.maximumf %58, %59 : vector<32x15xf32>
    %cst_32 = arith.constant 0.000000e+00 : f32
    %61 = vector.broadcast %cst_32 : f32 to vector<32x3xf32>
    %62 = tpu.concatenate %60, %61 in 1 : vector<32x15xf32>, vector<32x3xf32> -> vector<32x18xf32>
    %c0_33 = arith.constant 0 : index
    %c0_34 = arith.constant 0 : index
    %63 = vector.load %arg16[%c0_33, %c0_34] : memref<18x10xf32, #tpu.memory_space<vmem>>, vector<18x10xf32>
    %cst_35 = arith.constant dense<0.000000e+00> : vector<32x10xf32>
    %64 = tpu.matmul %62, %63, %cst_35 {dimension_numbers = #tpu.dot_dimension_numbers<[1], [0], [0], [1], [0, 0, 1, 1], [], []>} : vector<32x18xf32>, vector<18x10xf32>, vector<32x10xf32> -> vector<32x10xf32>
    %c0_36 = arith.constant 0 : index
    %c0_37 = arith.constant 0 : index
    %65 = vector.load %arg11[%c0_36, %c0_37] : memref<32x96xf32, #tpu.memory_space<vmem>>, vector<32x96xf32>
    %66 = vector.extract_strided_slice %64 {offsets = [0, 0], sizes = [32, 8], strides = [1, 1]} : vector<32x10xf32> to vector<32x8xf32>
    %67 = vector.extract_strided_slice %64 {offsets = [0, 1], sizes = [32, 8], strides = [1, 1]} : vector<32x10xf32> to vector<32x8xf32>
    %68 = vector.extract_strided_slice %64 {offsets = [0, 2], sizes = [32, 8], strides = [1, 1]} : vector<32x10xf32> to vector<32x8xf32>
    %69 = tpu.concatenate %66, %67, %68 in 0 : vector<32x8xf32>, vector<32x8xf32>, vector<32x8xf32> -> vector<96x8xf32>
    %cst_38 = arith.constant dense<0.000000e+00> : vector<32x8xf32>
    %70 = tpu.matmul %65, %69, %cst_38 {dimension_numbers = #tpu.dot_dimension_numbers<[1], [0], [0], [1], [0, 0, 1, 1], [], []>} : vector<32x96xf32>, vector<96x8xf32>, vector<32x8xf32> -> vector<32x8xf32>
    %c0_39 = arith.constant 0 : index
    %c0_40 = arith.constant 0 : index
    %71 = vector.load %arg12[%c0_39, %c0_40] : memref<32x1xf32, #tpu.memory_space<vmem>>, vector<32x1xf32>
    %72 = vector.broadcast %71 : vector<32x1xf32> to vector<32x8xf32>
    %73 = arith.addf %70, %72 : vector<32x8xf32>
    %c0_41 = arith.constant 0 : index
    %c0_42 = arith.constant 0 : index
    %74 = vector.load %arg13[%c0_41, %c0_42] : memref<32x1xf32, #tpu.memory_space<vmem>>, vector<32x1xf32>
    %75 = vector.broadcast %74 : vector<32x1xf32> to vector<32x8xf32>
    %76 = arith.maximumf %73, %75 : vector<32x8xf32>
    %77 = vector.extract_strided_slice %76 {offsets = [0, 0], sizes = [32, 7], strides = [1, 1]} : vector<32x8xf32> to vector<32x7xf32>
    %78 = vector.extract_strided_slice %76 {offsets = [0, 1], sizes = [32, 7], strides = [1, 1]} : vector<32x8xf32> to vector<32x7xf32>
    %79 = arith.maximumf %77, %78 : vector<32x7xf32>
    %cst_43 = arith.constant 0.000000e+00 : f32
    %80 = vector.broadcast %cst_43 : f32 to vector<32x3xf32>
    %81 = tpu.concatenate %79, %80 in 1 : vector<32x7xf32>, vector<32x3xf32> -> vector<32x10xf32>
    %c0_44 = arith.constant 0 : index
    %c0_45 = arith.constant 0 : index
    %82 = vector.load %arg17[%c0_44, %c0_45] : memref<10x4xf32, #tpu.memory_space<vmem>>, vector<10x4xf32>
    %cst_46 = arith.constant dense<0.000000e+00> : vector<32x4xf32>
    %83 = tpu.matmul %81, %82, %cst_46 {dimension_numbers = #tpu.dot_dimension_numbers<[1], [0], [0], [1], [0, 0, 1, 1], [], []>} : vector<32x10xf32>, vector<10x4xf32>, vector<32x4xf32> -> vector<32x4xf32>
    %84 = vector.extract_strided_slice %83 {offsets = [0, 0], sizes = [32, 1], strides = [1, 1]} : vector<32x4xf32> to vector<32x1xf32>
    %85 = vector.extract_strided_slice %83 {offsets = [0, 1], sizes = [32, 1], strides = [1, 1]} : vector<32x4xf32> to vector<32x1xf32>
    %86 = vector.extract_strided_slice %83 {offsets = [0, 2], sizes = [32, 1], strides = [1, 1]} : vector<32x4xf32> to vector<32x1xf32>
    %87 = vector.extract_strided_slice %83 {offsets = [0, 3], sizes = [32, 1], strides = [1, 1]} : vector<32x4xf32> to vector<32x1xf32>
    %88 = tpu.concatenate %84, %85, %86, %87 in 0 : vector<32x1xf32>, vector<32x1xf32>, vector<32x1xf32>, vector<32x1xf32> -> vector<128x1xf32>
    %c0_47 = arith.constant 0 : index
    %c0_48 = arith.constant 0 : index
    %89 = vector.load %arg18[%c0_47, %c0_48] : memref<10x128xf32, #tpu.memory_space<vmem>>, vector<10x128xf32>
    %cst_49 = arith.constant dense<0.000000e+00> : vector<10x1xf32>
    %90 = tpu.matmul %89, %88, %cst_49 {dimension_numbers = #tpu.dot_dimension_numbers<[1], [0], [0], [1], [0, 0, 1, 1], [], []>} : vector<10x128xf32>, vector<128x1xf32>, vector<10x1xf32> -> vector<10x1xf32>
    %c0_50 = arith.constant 0 : index
    %c0_51 = arith.constant 0 : index
    %91 = vector.load %arg19[%c0_50, %c0_51] : memref<10x1xf32, #tpu.memory_space<vmem>>, vector<10x1xf32>
    %92 = arith.addf %90, %91 : vector<10x1xf32>
    %c0_52 = arith.constant 0 : index
    %c0_53 = arith.constant 0 : index
    %c0_54 = arith.constant 0 : index
    %93 = vector.load %arg20[%c0_52, %c0_53, %c0_54] : memref<1x10x1xf32, #tpu.memory_space<vmem>>, vector<1x10x1xf32>
    %94 = vector.shape_cast %93 : vector<1x10x1xf32> to vector<10x1xf32>
    %95 = vector.shape_cast %92 : vector<10x1xf32> to vector<1x10x1xf32>
    tpu.vector_store %arg20[%c0_52, %c0_53, %c0_54], %95 {strides = array<i32>} : memref<1x10x1xf32, #tpu.memory_space<vmem>>, vector<1x10x1xf32>,
    return
  }
  func.func @transform_0(%arg0: i32) -> (i32, i32, i32) {
    %c0_i32 = arith.constant 0 : i32
    %c0_i32_0 = arith.constant 0 : i32
    %c0_i32_1 = arith.constant 0 : i32
    return %arg0, %c0_i32, %c0_i32_0 : i32, i32, i32
  }
  func.func @transform_1(%arg0: i32) -> (i32, i32) {
    %c0_i32 = arith.constant 0 : i32
    %c0_i32_0 = arith.constant 0 : i32
    %c0_i32_1 = arith.constant 0 : i32
    return %c0_i32, %c0_i32_0 : i32, i32
  }
  func.func @transform_2(%arg0: i32) -> (i32, i32) {
    %c0_i32 = arith.constant 0 : i32
    %c0_i32_0 = arith.constant 0 : i32
    %c0_i32_1 = arith.constant 0 : i32
    return %c0_i32, %c0_i32_0 : i32, i32
  }
  func.func @transform_3(%arg0: i32) -> (i32, i32) {
    %c0_i32 = arith.constant 0 : i32
    %c0_i32_0 = arith.constant 0 : i32
    %c0_i32_1 = arith.constant 0 : i32
    return %c0_i32, %c0_i32_0 : i32, i32
  }
  func.func @transform_4(%arg0: i32) -> (i32, i32) {
    %c0_i32 = arith.constant 0 : i32
    %c0_i32_0 = arith.constant 0 : i32
    %c0_i32_1 = arith.constant 0 : i32
    return %c0_i32, %c0_i32_0 : i32, i32
  }
  func.func @transform_5(%arg0: i32) -> (i32, i32) {
    %c0_i32 = arith.constant 0 : i32
    %c0_i32_0 = arith.constant 0 : i32
    %c0_i32_1 = arith.constant 0 : i32
    return %c0_i32, %c0_i32_0 : i32, i32
  }
  func.func @transform_6(%arg0: i32) -> (i32, i32) {
    %c0_i32 = arith.constant 0 : i32
    %c0_i32_0 = arith.constant 0 : i32
    %c0_i32_1 = arith.constant 0 : i32
    return %c0_i32, %c0_i32_0 : i32, i32
  }
  func.func @transform_7(%arg0: i32) -> (i32, i32) {
    %c0_i32 = arith.constant 0 : i32
    %c0_i32_0 = arith.constant 0 : i32
    %c0_i32_1 = arith.constant 0 : i32
    return %c0_i32, %c0_i32_0 : i32, i32
  }
  func.func @transform_8(%arg0: i32) -> (i32, i32) {
    %c0_i32 = arith.constant 0 : i32
    %c0_i32_0 = arith.constant 0 : i32
    %c0_i32_1 = arith.constant 0 : i32
    return %c0_i32, %c0_i32_0 : i32, i32
  }
  func.func @transform_9(%arg0: i32) -> (i32, i32) {
    %c0_i32 = arith.constant 0 : i32
    %c0_i32_0 = arith.constant 0 : i32
    %c0_i32_1 = arith.constant 0 : i32
    return %c0_i32, %c0_i32_0 : i32, i32
  }
  func.func @transform_10(%arg0: i32) -> (i32, i32) {
    %c0_i32 = arith.constant 0 : i32
    %c0_i32_0 = arith.constant 0 : i32
    %c0_i32_1 = arith.constant 0 : i32
    return %c0_i32, %c0_i32_0 : i32, i32
  }
  func.func @transform_11(%arg0: i32) -> (i32, i32) {
    %c0_i32 = arith.constant 0 : i32
    %c0_i32_0 = arith.constant 0 : i32
    %c0_i32_1 = arith.constant 0 : i32
    return %c0_i32, %c0_i32_0 : i32, i32
  }
  func.func @transform_12(%arg0: i32) -> (i32, i32) {
    %c0_i32 = arith.constant 0 : i32
    %c0_i32_0 = arith.constant 0 : i32
    %c0_i32_1 = arith.constant 0 : i32
    return %c0_i32, %c0_i32_0 : i32, i32
  }
  func.func @transform_13(%arg0: i32) -> (i32, i32) {
    %c0_i32 = arith.constant 0 : i32
    %c0_i32_0 = arith.constant 0 : i32
    %c0_i32_1 = arith.constant 0 : i32
    return %c0_i32, %c0_i32_0 : i32, i32
  }
  func.func @transform_14(%arg0: i32) -> (i32, i32) {
    %c0_i32 = arith.constant 0 : i32
    %c0_i32_0 = arith.constant 0 : i32
    %c0_i32_1 = arith.constant 0 : i32
    return %c0_i32, %c0_i32_0 : i32, i32
  }
  func.func @transform_15(%arg0: i32) -> (i32, i32) {
    %c0_i32 = arith.constant 0 : i32
    %c0_i32_0 = arith.constant 0 : i32
    %c0_i32_1 = arith.constant 0 : i32
    return %c0_i32, %c0_i32_0 : i32, i32
  }
  func.func @transform_16(%arg0: i32) -> (i32, i32) {
    %c0_i32 = arith.constant 0 : i32
    %c0_i32_0 = arith.constant 0 : i32
    %c0_i32_1 = arith.constant 0 : i32
    return %c0_i32, %c0_i32_0 : i32, i32
  }
  func.func @transform_17(%arg0: i32) -> (i32, i32) {
    %c0_i32 = arith.constant 0 : i32
    %c0_i32_0 = arith.constant 0 : i32
    %c0_i32_1 = arith.constant 0 : i32
    return %c0_i32, %c0_i32_0 : i32, i32
  }
  func.func @transform_18(%arg0: i32) -> (i32, i32) {
    %c0_i32 = arith.constant 0 : i32
    %c0_i32_0 = arith.constant 0 : i32
    %c0_i32_1 = arith.constant 0 : i32
    return %c0_i32, %c0_i32_0 : i32, i32
  }
  func.func @transform_19(%arg0: i32) -> (i32, i32, i32) {
    %c0_i32 = arith.constant 0 : i32
    %c0_i32_0 = arith.constant 0 : i32
    %c0_i32_1 = arith.constant 0 : i32
    return %arg0, %c0_i32, %c0_i32_0 : i32, i32, i32
  }
}

</mosaic_0001>

<llo_original>
// kernel: tpu_custom_call.1
$region0: #{tpu_custom_call.1}
  #allocation0 [shape = 'u32[]', space=smem, size = 0x4, offset = 0x4, fixed_abs, tag = 'smem constant byte address 0x4 - core index']
  #allocation1 [shape = 'u32[72,128]{1,0:T(1,128)}', space=vmem, size = 0x9000, scoped, tag = 'internal scratch']
  %s0 = inlined_call_operand.vmem [shape: f32[2,1,66], index: 0, kind: input, shape index: {}]
  %s1 = inlined_call_operand.vmem [shape: f32[8,3], index: 1, kind: input, shape index: {}]
  %s2 = inlined_call_operand.vmem [shape: f32[8,1], index: 2, kind: input, shape index: {}]
  %s3 = inlined_call_operand.vmem [shape: f32[8,1], index: 3, kind: input, shape index: {}]
  %s4 = inlined_call_operand.vmem [shape: f32[16,24], index: 4, kind: input, shape index: {}]
  %s5 = inlined_call_operand.vmem [shape: f32[16,1], index: 5, kind: input, shape index: {}]
  %s6 = inlined_call_operand.vmem [shape: f32[16,1], index: 6, kind: input, shape index: {}]
  %s7 = inlined_call_operand.vmem [shape: f32[32,48], index: 7, kind: input, shape index: {}]
  %s8 = inlined_call_operand.vmem [shape: f32[32,1], index: 8, kind: input, shape index: {}]
  %s9 = inlined_call_operand.vmem [shape: f32[32,1], index: 9, kind: input, shape index: {}]
  %s10 = inlined_call_operand.vmem [shape: f32[32,96], index: 10, kind: input, shape index: {}]
  %s11 = inlined_call_operand.vmem [shape: f32[32,1], index: 11, kind: input, shape index: {}]
  %s12 = inlined_call_operand.vmem [shape: f32[32,1], index: 12, kind: input, shape index: {}]
  %s13 = inlined_call_operand.vmem [shape: f32[66,34], index: 13, kind: input, shape index: {}]
  %s14 = inlined_call_operand.vmem [shape: f32[34,18], index: 14, kind: input, shape index: {}]
  %s15 = inlined_call_operand.vmem [shape: f32[18,10], index: 15, kind: input, shape index: {}]
  %s16 = inlined_call_operand.vmem [shape: f32[10,4], index: 16, kind: input, shape index: {}]
  %s17 = inlined_call_operand.vmem [shape: f32[10,128], index: 17, kind: input, shape index: {}]
  %s18 = inlined_call_operand.vmem [shape: f32[10,1], index: 18, kind: input, shape index: {}]
  %s19 = inlined_call_operand.vmem [shape: f32[2,10,1], index: 19, kind: output, shape index: {}]
  %s20 = sld [smem:[#allocation0]]
  $region109: #{tpu_custom_call.1} parent=0
    _
  %s22 = ssub.s32 1, %s20
  %s23 = scalar_select 0, %s22, %s20
  loop: start=0, step=1, limit=4
  $region2: #{tpu_custom_call.1} parent=0 // loop_pre_header
    _
  $region3: #{tpu_custom_call.1} parent=0 // loop_header
    %s25 = sphi 0, %s29
    %p26 = scmp.ge.s32.totalorder %s25, 4
    %s35 = sphi 0, %s37
    %s38 = sphi 0, %s35
    %s39 = sphi 0, %s38
    %s55 = sphi 0, %s39
    %s59 = sphi 0, %s59
    %s61 = sphi 0, %s59
    %s62 = sphi 0, %s61
    %s76 = sphi 0, %s62
    %s80 = sphi 0, %s80
    %s82 = sphi 0, %s80
    %s83 = sphi 0, %s82
    %s97 = sphi 0, %s83
    %s101 = sphi 0, %s101
    %s103 = sphi 0, %s101
    %s104 = sphi 0, %s103
    %s118 = sphi 0, %s104
    %s122 = sphi 0, %s122
    %s124 = sphi 0, %s122
    %s125 = sphi 0, %s124
    %s139 = sphi 0, %s125
    %s143 = sphi 0, %s143
    %s145 = sphi 0, %s143
    %s146 = sphi 0, %s145
    %s160 = sphi 0, %s146
    %s164 = sphi 0, %s164
    %s166 = sphi 0, %s164
    %s167 = sphi 0, %s166
    %s181 = sphi 0, %s167
    %s185 = sphi 0, %s185
    %s187 = sphi 0, %s185
    %s188 = sphi 0, %s187
    %s202 = sphi 0, %s188
    %s206 = sphi 0, %s206
    %s208 = sphi 0, %s206
    %s209 = sphi 0, %s208
    %s223 = sphi 0, %s209
    %s227 = sphi 0, %s227
    %s229 = sphi 0, %s227
    %s230 = sphi 0, %s229
    %s244 = sphi 0, %s230
    %s248 = sphi 0, %s248
    %s250 = sphi 0, %s248
    %s251 = sphi 0, %s250
    %s265 = sphi 0, %s251
    %s269 = sphi 0, %s269
    %s271 = sphi 0, %s269
    %s272 = sphi 0, %s271
    %s286 = sphi 0, %s272
    %s290 = sphi 0, %s290
    %s292 = sphi 0, %s290
    %s293 = sphi 0, %s292
    %s307 = sphi 0, %s293
    %s311 = sphi 0, %s311
    %s313 = sphi 0, %s311
    %s314 = sphi 0, %s313
    %s328 = sphi 0, %s314
    %s332 = sphi 0, %s332
    %s334 = sphi 0, %s332
    %s335 = sphi 0, %s334
    %s349 = sphi 0, %s335
    %s353 = sphi 0, %s353
    %s355 = sphi 0, %s353
    %s356 = sphi 0, %s355
    %s370 = sphi 0, %s356
    %s374 = sphi 0, %s374
    %s376 = sphi 0, %s374
    %s377 = sphi 0, %s376
    %s391 = sphi 0, %s377
    %s395 = sphi 0, %s395
    %s397 = sphi 0, %s395
    %s398 = sphi 0, %s397
    %s412 = sphi 0, %s398
    %s416 = sphi 0, %s416
    %s418 = sphi 0, %s416
    %s419 = sphi 0, %s418
    %s433 = sphi 0, %s419
    %s439 = sphi 0, %s441
    %s442 = sphi 0, %s439
    %s443 = sphi 0, %s442
    %s459 = sphi 0, %s443
  $region4: #{tpu_custom_call.1} parent=0 // loop_header_branch
    %28 = sbr.rel (%p26) target = $region8
  $region5: #{tpu_custom_call.1} parent=0 // loop_body
    %s30 = ssub.s32 %s25, 1
    %s31 = ssub.s32 %s25, 2
    %s32 = sadd.s32 %s25, 1
    %s33 = ssub.s32 %s25, %s32
    %p34 = scmp.eq.s32.totalorder %s33, 0
    %s36 = sadd.s32 %s35, 1
    %s37 = scalar_select %p34, %s35, %s36
    %p40 = pneg %p34
    %p41 = scmp.eq.s32.totalorder %s25, 1
    %p42 = por %p40, %p41
    %p43 = scmp.ne.s32.totalorder %s35, %s38
    %p44 = scmp.eq.s32.totalorder %s25, 0
    %p45 = por %p43, %p44
    %p46 = scmp.ne.s32.totalorder %s35, %s38
    %p47 = scmp.eq.s32.totalorder %s30, 1
    %p48 = por %p46, %p47
    %p49 = scmp.ne.s32.totalorder %s38, %s39
    %p50 = scmp.eq.s32.totalorder %s30, 0
    %p51 = por %p49, %p50
    %p52 = scmp.ne.s32.totalorder %s38, %s39
    %p53 = scmp.eq.s32.totalorder %s31, 1
    %p54 = por %p52, %p53
    %p56 = scmp.ne.s32.totalorder %s39, %s55
    %p57 = scmp.eq.s32.totalorder %s31, 0
    %p58 = por %p56, %p57
    %s60 = sadd.s32 %s59, 1
    %p63 = scmp.eq.s32.totalorder %s25, 1
    %p64 = scmp.ne.s32.totalorder %s59, %s61
    %p65 = scmp.eq.s32.totalorder %s25, 0
    %p66 = por %p64, %p65
    %p67 = scmp.ne.s32.totalorder %s59, %s61
    %p68 = scmp.eq.s32.totalorder %s30, 1
    %p69 = por %p67, %p68
    %p70 = scmp.ne.s32.totalorder %s61, %s62
    %p71 = scmp.eq.s32.totalorder %s30, 0
    %p72 = por %p70, %p71
    %p73 = scmp.ne.s32.totalorder %s61, %s62
    %p74 = scmp.eq.s32.totalorder %s31, 1
    %p75 = por %p73, %p74
    %p77 = scmp.ne.s32.totalorder %s62, %s76
    %p78 = scmp.eq.s32.totalorder %s31, 0
    %p79 = por %p77, %p78
    %s81 = sadd.s32 %s80, 1
    %p84 = scmp.eq.s32.totalorder %s25, 1
    %p85 = scmp.ne.s32.totalorder %s80, %s82
    %p86 = scmp.eq.s32.totalorder %s25, 0
    %p87 = por %p85, %p86
    %p88 = scmp.ne.s32.totalorder %s80, %s82
    %p89 = scmp.eq.s32.totalorder %s30, 1
    %p90 = por %p88, %p89
    %p91 = scmp.ne.s32.totalorder %s82, %s83
    %p92 = scmp.eq.s32.totalorder %s30, 0
    %p93 = por %p91, %p92
    %p94 = scmp.ne.s32.totalorder %s82, %s83
    %p95 = scmp.eq.s32.totalorder %s31, 1
    %p96 = por %p94, %p95
    %p98 = scmp.ne.s32.totalorder %s83, %s97
    %p99 = scmp.eq.s32.totalorder %s31, 0
    %p100 = por %p98, %p99
    %s102 = sadd.s32 %s101, 1
    %p105 = scmp.eq.s32.totalorder %s25, 1
    %p106 = scmp.ne.s32.totalorder %s101, %s103
    %p107 = scmp.eq.s32.totalorder %s25, 0
    %p108 = por %p106, %p107
    %p109 = scmp.ne.s32.totalorder %s101, %s103
    %p110 = scmp.eq.s32.totalorder %s30, 1
    %p111 = por %p109, %p110
    %p112 = scmp.ne.s32.totalorder %s103, %s104
    %p113 = scmp.eq.s32.totalorder %s30, 0
    %p114 = por %p112, %p113
    %p115 = scmp.ne.s32.totalorder %s103, %s104
    %p116 = scmp.eq.s32.totalorder %s31, 1
    %p117 = por %p115, %p116
    %p119 = scmp.ne.s32.totalorder %s104, %s118
    %p120 = scmp.eq.s32.totalorder %s31, 0
    %p121 = por %p119, %p120
    %s123 = sadd.s32 %s122, 1
    %p126 = scmp.eq.s32.totalorder %s25, 1
    %p127 = scmp.ne.s32.totalorder %s122, %s124
    %p128 = scmp.eq.s32.totalorder %s25, 0
    %p129 = por %p127, %p128
    %p130 = scmp.ne.s32.totalorder %s122, %s124
    %p131 = scmp.eq.s32.totalorder %s30, 1
    %p132 = por %p130, %p131
    %p133 = scmp.ne.s32.totalorder %s124, %s125
    %p134 = scmp.eq.s32.totalorder %s30, 0
    %p135 = por %p133, %p134
    %p136 = scmp.ne.s32.totalorder %s124, %s125
    %p137 = scmp.eq.s32.totalorder %s31, 1
    %p138 = por %p136, %p137
    %p140 = scmp.ne.s32.totalorder %s125, %s139
    %p141 = scmp.eq.s32.totalorder %s31, 0
    %p142 = por %p140, %p141
    %s144 = sadd.s32 %s143, 1
    %p147 = scmp.eq.s32.totalorder %s25, 1
    %p148 = scmp.ne.s32.totalorder %s143, %s145
    %p149 = scmp.eq.s32.totalorder %s25, 0
    %p150 = por %p148, %p149
    %p151 = scmp.ne.s32.totalorder %s143, %s145
    %p152 = scmp.eq.s32.totalorder %s30, 1
    %p153 = por %p151, %p152
    %p154 = scmp.ne.s32.totalorder %s145, %s146
    %p155 = scmp.eq.s32.totalorder %s30, 0
    %p156 = por %p154, %p155
    %p157 = scmp.ne.s32.totalorder %s145, %s146
    %p158 = scmp.eq.s32.totalorder %s31, 1
    %p159 = por %p157, %p158
    %p161 = scmp.ne.s32.totalorder %s146, %s160
    %p162 = scmp.eq.s32.totalorder %s31, 0
    %p163 = por %p161, %p162
    %s165 = sadd.s32 %s164, 1
    %p168 = scmp.eq.s32.totalorder %s25, 1
    %p169 = scmp.ne.s32.totalorder %s164, %s166
    %p170 = scmp.eq.s32.totalorder %s25, 0
    %p171 = por %p169, %p170
    %p172 = scmp.ne.s32.totalorder %s164, %s166
    %p173 = scmp.eq.s32.totalorder %s30, 1
    %p174 = por %p172, %p173
    %p175 = scmp.ne.s32.totalorder %s166, %s167
    %p176 = scmp.eq.s32.totalorder %s30, 0
    %p177 = por %p175, %p176
    %p178 = scmp.ne.s32.totalorder %s166, %s167
    %p179 = scmp.eq.s32.totalorder %s31, 1
    %p180 = por %p178, %p179
    %p182 = scmp.ne.s32.totalorder %s167, %s181
    %p183 = scmp.eq.s32.totalorder %s31, 0
    %p184 = por %p182, %p183
    %s186 = sadd.s32 %s185, 1
    %p189 = scmp.eq.s32.totalorder %s25, 1
    %p190 = scmp.ne.s32.totalorder %s185, %s187
    %p191 = scmp.eq.s32.totalorder %s25, 0
    %p192 = por %p190, %p191
    %p193 = scmp.ne.s32.totalorder %s185, %s187
    %p194 = scmp.eq.s32.totalorder %s30, 1
    %p195 = por %p193, %p194
    %p196 = scmp.ne.s32.totalorder %s187, %s188
    %p197 = scmp.eq.s32.totalorder %s30, 0
    %p198 = por %p196, %p197
    %p199 = scmp.ne.s32.totalorder %s187, %s188
    %p200 = scmp.eq.s32.totalorder %s31, 1
    %p201 = por %p199, %p200
    %p203 = scmp.ne.s32.totalorder %s188, %s202
    %p204 = scmp.eq.s32.totalorder %s31, 0
    %p205 = por %p203, %p204
    %s207 = sadd.s32 %s206, 1
    %p210 = scmp.eq.s32.totalorder %s25, 1
    %p211 = scmp.ne.s32.totalorder %s206, %s208
    %p212 = scmp.eq.s32.totalorder %s25, 0
    %p213 = por %p211, %p212
    %p214 = scmp.ne.s32.totalorder %s206, %s208
    %p215 = scmp.eq.s32.totalorder %s30, 1
    %p216 = por %p214, %p215
    %p217 = scmp.ne.s32.totalorder %s208, %s209
    %p218 = scmp.eq.s32.totalorder %s30, 0
    %p219 = por %p217, %p218
    %p220 = scmp.ne.s32.totalorder %s208, %s209
    %p221 = scmp.eq.s32.totalorder %s31, 1
    %p222 = por %p220, %p221
    %p224 = scmp.ne.s32.totalorder %s209, %s223
    %p225 = scmp.eq.s32.totalorder %s31, 0
    %p226 = por %p224, %p225
    %s228 = sadd.s32 %s227, 1
    %p231 = scmp.eq.s32.totalorder %s25, 1
    %p232 = scmp.ne.s32.totalorder %s227, %s229
    %p233 = scmp.eq.s32.totalorder %s25, 0
    %p234 = por %p232, %p233
    %p235 = scmp.ne.s32.totalorder %s227, %s229
    %p236 = scmp.eq.s32.totalorder %s30, 1
    %p237 = por %p235, %p236
    %p238 = scmp.ne.s32.totalorder %s229, %s230
    %p239 = scmp.eq.s32.totalorder %s30, 0
    %p240 = por %p238, %p239
    %p241 = scmp.ne.s32.totalorder %s229, %s230
    %p242 = scmp.eq.s32.totalorder %s31, 1
    %p243 = por %p241, %p242
    %p245 = scmp.ne.s32.totalorder %s230, %s244
    %p246 = scmp.eq.s32.totalorder %s31, 0
    %p247 = por %p245, %p246
    %s249 = sadd.s32 %s248, 1
    %p252 = scmp.eq.s32.totalorder %s25, 1
    %p253 = scmp.ne.s32.totalorder %s248, %s250
    %p254 = scmp.eq.s32.totalorder %s25, 0
    %p255 = por %p253, %p254
    %p256 = scmp.ne.s32.totalorder %s248, %s250
    %p257 = scmp.eq.s32.totalorder %s30, 1
    %p258 = por %p256, %p257
    %p259 = scmp.ne.s32.totalorder %s250, %s251
    %p260 = scmp.eq.s32.totalorder %s30, 0
    %p261 = por %p259, %p260
    %p262 = scmp.ne.s32.totalorder %s250, %s251
    %p263 = scmp.eq.s32.totalorder %s31, 1
    %p264 = por %p262, %p263
    %p266 = scmp.ne.s32.totalorder %s251, %s265
    %p267 = scmp.eq.s32.totalorder %s31, 0
    %p268 = por %p266, %p267
    %s270 = sadd.s32 %s269, 1
    %p273 = scmp.eq.s32.totalorder %s25, 1
    %p274 = scmp.ne.s32.totalorder %s269, %s271
    %p275 = scmp.eq.s32.totalorder %s25, 0
    %p276 = por %p274, %p275
    %p277 = scmp.ne.s32.totalorder %s269, %s271
    %p278 = scmp.eq.s32.totalorder %s30, 1
    %p279 = por %p277, %p278
    %p280 = scmp.ne.s32.totalorder %s271, %s272
    %p281 = scmp.eq.s32.totalorder %s30, 0
    %p282 = por %p280, %p281
    %p283 = scmp.ne.s32.totalorder %s271, %s272
    %p284 = scmp.eq.s32.totalorder %s31, 1
    %p285 = por %p283, %p284
    %p287 = scmp.ne.s32.totalorder %s272, %s286
    %p288 = scmp.eq.s32.totalorder %s31, 0
    %p289 = por %p287, %p288
    %s291 = sadd.s32 %s290, 1
    %p294 = scmp.eq.s32.totalorder %s25, 1
    %p295 = scmp.ne.s32.totalorder %s290, %s292
    %p296 = scmp.eq.s32.totalorder %s25, 0
    %p297 = por %p295, %p296
    %p298 = scmp.ne.s32.totalorder %s290, %s292
    %p299 = scmp.eq.s32.totalorder %s30, 1
    %p300 = por %p298, %p299
    %p301 = scmp.ne.s32.totalorder %s292, %s293
    %p302 = scmp.eq.s32.totalorder %s30, 0
    %p303 = por %p301, %p302
    %p304 = scmp.ne.s32.totalorder %s292, %s293
    %p305 = scmp.eq.s32.totalorder %s31, 1
    %p306 = por %p304, %p305
    %p308 = scmp.ne.s32.totalorder %s293, %s307
    %p309 = scmp.eq.s32.totalorder %s31, 0
    %p310 = por %p308, %p309
    %s312 = sadd.s32 %s311, 1
    %p315 = scmp.eq.s32.totalorder %s25, 1
    %p316 = scmp.ne.s32.totalorder %s311, %s313
    %p317 = scmp.eq.s32.totalorder %s25, 0
    %p318 = por %p316, %p317
    %p319 = scmp.ne.s32.totalorder %s311, %s313
    %p320 = scmp.eq.s32.totalorder %s30, 1
    %p321 = por %p319, %p320
    %p322 = scmp.ne.s32.totalorder %s313, %s314
    %p323 = scmp.eq.s32.totalorder %s30, 0
    %p324 = por %p322, %p323
    %p325 = scmp.ne.s32.totalorder %s313, %s314
    %p326 = scmp.eq.s32.totalorder %s31, 1
    %p327 = por %p325, %p326
    %p329 = scmp.ne.s32.totalorder %s314, %s328
    %p330 = scmp.eq.s32.totalorder %s31, 0
    %p331 = por %p329, %p330
    %s333 = sadd.s32 %s332, 1
    %p336 = scmp.eq.s32.totalorder %s25, 1
    %p337 = scmp.ne.s32.totalorder %s332, %s334
    %p338 = scmp.eq.s32.totalorder %s25, 0
    %p339 = por %p337, %p338
    %p340 = scmp.ne.s32.totalorder %s332, %s334
    %p341 = scmp.eq.s32.totalorder %s30, 1
    %p342 = por %p340, %p341
    %p343 = scmp.ne.s32.totalorder %s334, %s335
    %p344 = scmp.eq.s32.totalorder %s30, 0
    %p345 = por %p343, %p344
    %p346 = scmp.ne.s32.totalorder %s334, %s335
    %p347 = scmp.eq.s32.totalorder %s31, 1
    %p348 = por %p346, %p347
    %p350 = scmp.ne.s32.totalorder %s335, %s349
    %p351 = scmp.eq.s32.totalorder %s31, 0
    %p352 = por %p350, %p351
    %s354 = sadd.s32 %s353, 1
    %p357 = scmp.eq.s32.totalorder %s25, 1
    %p358 = scmp.ne.s32.totalorder %s353, %s355
    %p359 = scmp.eq.s32.totalorder %s25, 0
    %p360 = por %p358, %p359
    %p361 = scmp.ne.s32.totalorder %s353, %s355
    %p362 = scmp.eq.s32.totalorder %s30, 1
    %p363 = por %p361, %p362
    %p364 = scmp.ne.s32.totalorder %s355, %s356
    %p365 = scmp.eq.s32.totalorder %s30, 0
    %p366 = por %p364, %p365
    %p367 = scmp.ne.s32.totalorder %s355, %s356
    %p368 = scmp.eq.s32.totalorder %s31, 1
    %p369 = por %p367, %p368
    %p371 = scmp.ne.s32.totalorder %s356, %s370
    %p372 = scmp.eq.s32.totalorder %s31, 0
    %p373 = por %p371, %p372
    %s375 = sadd.s32 %s374, 1
    %p378 = scmp.eq.s32.totalorder %s25, 1
    %p379 = scmp.ne.s32.totalorder %s374, %s376
    %p380 = scmp.eq.s32.totalorder %s25, 0
    %p381 = por %p379, %p380
    %p382 = scmp.ne.s32.totalorder %s374, %s376
    %p383 = scmp.eq.s32.totalorder %s30, 1
    %p384 = por %p382, %p383
    %p385 = scmp.ne.s32.totalorder %s376, %s377
    %p386 = scmp.eq.s32.totalorder %s30, 0
    %p387 = por %p385, %p386
    %p388 = scmp.ne.s32.totalorder %s376, %s377
    %p389 = scmp.eq.s32.totalorder %s31, 1
    %p390 = por %p388, %p389
    %p392 = scmp.ne.s32.totalorder %s377, %s391
    %p393 = scmp.eq.s32.totalorder %s31, 0
    %p394 = por %p392, %p393
    %s396 = sadd.s32 %s395, 1
    %p399 = scmp.eq.s32.totalorder %s25, 1
    %p400 = scmp.ne.s32.totalorder %s395, %s397
    %p401 = scmp.eq.s32.totalorder %s25, 0
    %p402 = por %p400, %p401
    %p403 = scmp.ne.s32.totalorder %s395, %s397
    %p404 = scmp.eq.s32.totalorder %s30, 1
    %p405 = por %p403, %p404
    %p406 = scmp.ne.s32.totalorder %s397, %s398
    %p407 = scmp.eq.s32.totalorder %s30, 0
    %p408 = por %p406, %p407
    %p409 = scmp.ne.s32.totalorder %s397, %s398
    %p410 = scmp.eq.s32.totalorder %s31, 1
    %p411 = por %p409, %p410
    %p413 = scmp.ne.s32.totalorder %s398, %s412
    %p414 = scmp.eq.s32.totalorder %s31, 0
    %p415 = por %p413, %p414
    %s417 = sadd.s32 %s416, 1
    %p420 = scmp.eq.s32.totalorder %s25, 1
    %p421 = scmp.ne.s32.totalorder %s416, %s418
    %p422 = scmp.eq.s32.totalorder %s25, 0
    %p423 = por %p421, %p422
    %p424 = scmp.ne.s32.totalorder %s416, %s418
    %p425 = scmp.eq.s32.totalorder %s30, 1
    %p426 = por %p424, %p425
    %p427 = scmp.ne.s32.totalorder %s418, %s419
    %p428 = scmp.eq.s32.totalorder %s30, 0
    %p429 = por %p427, %p428
    %p430 = scmp.ne.s32.totalorder %s418, %s419
    %p431 = scmp.eq.s32.totalorder %s31, 1
    %p432 = por %p430, %p431
    %p434 = scmp.ne.s32.totalorder %s419, %s433
    %p435 = scmp.eq.s32.totalorder %s31, 0
    %p436 = por %p434, %p435
    %s437 = ssub.s32 %s25, %s32
    %p438 = scmp.eq.s32.totalorder %s437, 0
    %s440 = sadd.s32 %s439, 1
    %s441 = scalar_select %p438, %s439, %s440
    %p444 = pneg %p438
    %p445 = scmp.eq.s32.totalorder %s25, 1
    %p446 = por %p444, %p445
    %p447 = scmp.ne.s32.totalorder %s439, %s442
    %p448 = scmp.eq.s32.totalorder %s25, 0
    %p449 = por %p447, %p448
    %p450 = scmp.ne.s32.totalorder %s439, %s442
    %p451 = scmp.eq.s32.totalorder %s30, 1
    %p452 = por %p450, %p451
    %p453 = scmp.ne.s32.totalorder %s442, %s443
    %p454 = scmp.eq.s32.totalorder %s30, 0
    %p455 = por %p453, %p454
    %p456 = scmp.ne.s32.totalorder %s442, %s443
    %p457 = scmp.eq.s32.totalorder %s31, 1
    %p458 = por %p456, %p457
    %p460 = scmp.ne.s32.totalorder %s443, %s459
    %p461 = scmp.eq.s32.totalorder %s31, 0
    %p462 = por %p460, %p461
    %p463 = scmp.le.s32.totalorder 1, %s25
    %p464 = scmp.lt.s32.totalorder %s25, 3
    %p465 = pnand %p463, %p464
    %p466 = pneg %p465
    // Predicated region
    $region9: #{tpu_custom_call.1} parent=5 // pred_check
      _
    $region10: #{tpu_custom_call.1} parent=5 // pred_check_branch
      %468 = sbr.rel (%p465) target = $region12
    $region11: #{tpu_custom_call.1} parent=5 // pred_region
      %s469 = ssub.s32 %s25, 1
      // Predicated region
      $region13: #{tpu_custom_call.1} parent=11 // pred_check
        %p470 = pneg %p72
      $region14: #{tpu_custom_call.1} parent=11 // pred_check_branch
        %472 = sbr.rel (%p470) target = $region16
      $region15: #{tpu_custom_call.1} parent=11 // pred_region
        _
      $region16: #{tpu_custom_call.1} parent=11 // pred_fallthru
        _
      // Predicated region
      $region17: #{tpu_custom_call.1} parent=11 // pred_check
        %p473 = pneg %p93
      $region18: #{tpu_custom_call.1} parent=11 // pred_check_branch
        %475 = sbr.rel (%p473) target = $region20
      $region19: #{tpu_custom_call.1} parent=11 // pred_region
        _
      $region20: #{tpu_custom_call.1} parent=11 // pred_fallthru
        _
      // Predicated region
      $region21: #{tpu_custom_call.1} parent=11 // pred_check
        %p476 = pneg %p114
      $region22: #{tpu_custom_call.1} parent=11 // pred_check_branch
        %478 = sbr.rel (%p476) target = $region24
      $region23: #{tpu_custom_call.1} parent=11 // pred_region
        _
      $region24: #{tpu_custom_call.1} parent=11 // pred_fallthru
        _
      // Predicated region
      $region25: #{tpu_custom_call.1} parent=11 // pred_check
        %p479 = pneg %p135
      $region26: #{tpu_custom_call.1} parent=11 // pred_check_branch
        %481 = sbr.rel (%p479) target = $region28
      $region27: #{tpu_custom_call.1} parent=11 // pred_region
        _
      $region28: #{tpu_custom_call.1} parent=11 // pred_fallthru
        _
      // Predicated region
      $region29: #{tpu_custom_call.1} parent=11 // pred_check
        %p482 = pneg %p156
      $region30: #{tpu_custom_call.1} parent=11 // pred_check_branch
        %484 = sbr.rel (%p482) target = $region32
      $region31: #{tpu_custom_call.1} parent=11 // pred_region
        _
      $region32: #{tpu_custom_call.1} parent=11 // pred_fallthru
        _
      // Predicated region
      $region33: #{tpu_custom_call.1} parent=11 // pred_check
        %p485 = pneg %p177
      $region34: #{tpu_custom_call.1} parent=11 // pred_check_branch
        %487 = sbr.rel (%p485) target = $region36
      $region35: #{tpu_custom_call.1} parent=11 // pred_region
        _
      $region36: #{tpu_custom_call.1} parent=11 // pred_fallthru
        _
      // Predicated region
      $region37: #{tpu_custom_call.1} parent=11 // pred_check
        %p488 = pneg %p198
      $region38: #{tpu_custom_call.1} parent=11 // pred_check_branch
        %490 = sbr.rel (%p488) target = $region40
      $region39: #{tpu_custom_call.1} parent=11 // pred_region
        _
      $region40: #{tpu_custom_call.1} parent=11 // pred_fallthru
        _
      // Predicated region
      $region41: #{tpu_custom_call.1} parent=11 // pred_check
        %p491 = pneg %p219
      $region42: #{tpu_custom_call.1} parent=11 // pred_check_branch
        %493 = sbr.rel (%p491) target = $region44
      $region43: #{tpu_custom_call.1} parent=11 // pred_region
        _
      $region44: #{tpu_custom_call.1} parent=11 // pred_fallthru
        _
      // Predicated region
      $region45: #{tpu_custom_call.1} parent=11 // pred_check
        %p494 = pneg %p240
      $region46: #{tpu_custom_call.1} parent=11 // pred_check_branch
        %496 = sbr.rel (%p494) target = $region48
      $region47: #{tpu_custom_call.1} parent=11 // pred_region
        _
      $region48: #{tpu_custom_call.1} parent=11 // pred_fallthru
        _
      // Predicated region
      $region49: #{tpu_custom_call.1} parent=11 // pred_check
        %p497 = pneg %p261
      $region50: #{tpu_custom_call.1} parent=11 // pred_check_branch
        %499 = sbr.rel (%p497) target = $region52
      $region51: #{tpu_custom_call.1} parent=11 // pred_region
        _
      $region52: #{tpu_custom_call.1} parent=11 // pred_fallthru
        _
      // Predicated region
      $region53: #{tpu_custom_call.1} parent=11 // pred_check
        %p500 = pneg %p282
      $region54: #{tpu_custom_call.1} parent=11 // pred_check_branch
        %502 = sbr.rel (%p500) target = $region56
      $region55: #{tpu_custom_call.1} parent=11 // pred_region
        _
      $region56: #{tpu_custom_call.1} parent=11 // pred_fallthru
        _
      // Predicated region
      $region57: #{tpu_custom_call.1} parent=11 // pred_check
        %p503 = pneg %p303
      $region58: #{tpu_custom_call.1} parent=11 // pred_check_branch
        %505 = sbr.rel (%p503) target = $region60
      $region59: #{tpu_custom_call.1} parent=11 // pred_region
        _
      $region60: #{tpu_custom_call.1} parent=11 // pred_fallthru
        _
      // Predicated region
      $region61: #{tpu_custom_call.1} parent=11 // pred_check
        %p506 = pneg %p324
      $region62: #{tpu_custom_call.1} parent=11 // pred_check_branch
        %508 = sbr.rel (%p506) target = $region64
      $region63: #{tpu_custom_call.1} parent=11 // pred_region
        _
      $region64: #{tpu_custom_call.1} parent=11 // pred_fallthru
        _
      // Predicated region
      $region65: #{tpu_custom_call.1} parent=11 // pred_check
        %p509 = pneg %p345
      $region66: #{tpu_custom_call.1} parent=11 // pred_check_branch
        %511 = sbr.rel (%p509) target = $region68
      $region67: #{tpu_custom_call.1} parent=11 // pred_region
        _
      $region68: #{tpu_custom_call.1} parent=11 // pred_fallthru
        _
      // Predicated region
      $region69: #{tpu_custom_call.1} parent=11 // pred_check
        %p512 = pneg %p366
      $region70: #{tpu_custom_call.1} parent=11 // pred_check_branch
        %514 = sbr.rel (%p512) target = $region72
      $region71: #{tpu_custom_call.1} parent=11 // pred_region
        _
      $region72: #{tpu_custom_call.1} parent=11 // pred_fallthru
        _
      // Predicated region
      $region73: #{tpu_custom_call.1} parent=11 // pred_check
        %p515 = pneg %p387
      $region74: #{tpu_custom_call.1} parent=11 // pred_check_branch
        %517 = sbr.rel (%p515) target = $region76
      $region75: #{tpu_custom_call.1} parent=11 // pred_region
        _
      $region76: #{tpu_custom_call.1} parent=11 // pred_fallthru
        _
      // Predicated region
      $region77: #{tpu_custom_call.1} parent=11 // pred_check
        %p518 = pneg %p408
      $region78: #{tpu_custom_call.1} parent=11 // pred_check_branch
        %520 = sbr.rel (%p518) target = $region80
      $region79: #{tpu_custom_call.1} parent=11 // pred_region
        _
      $region80: #{tpu_custom_call.1} parent=11 // pred_fallthru
        _
      // Predicated region
      $region81: #{tpu_custom_call.1} parent=11 // pred_check
        %p521 = pneg %p429
      $region82: #{tpu_custom_call.1} parent=11 // pred_check_branch
        %523 = sbr.rel (%p521) target = $region84
      $region83: #{tpu_custom_call.1} parent=11 // pred_region
        _
      $region84: #{tpu_custom_call.1} parent=11 // pred_fallthru
        _
    $region12: #{tpu_custom_call.1} parent=5 // pred_fallthru
      _
    %p524 = scmp.lt.s32.totalorder %s25, 2
    // Predicated region
    $region85: #{tpu_custom_call.1} parent=5 // pred_check
      %p525 = pneg %p524
    $region86: #{tpu_custom_call.1} parent=5 // pred_check_branch
      %527 = sbr.rel (%p525) target = $region88
    $region87: #{tpu_custom_call.1} parent=5 // pred_region
      // Predicated region
      $region89: #{tpu_custom_call.1} parent=87 // pred_check
        %p528 = pneg %p45
      $region90: #{tpu_custom_call.1} parent=87 // pred_check_branch
        %530 = sbr.rel (%p528) target = $region92
      $region91: #{tpu_custom_call.1} parent=87 // pred_region
        %p531 = scmp.lt.s32.totalorder %s25, 1
        %s532 = scalar_select %p531, %s25, 1
        %s533 = scalar_lea.vmem %s0, %s532
      $region92: #{tpu_custom_call.1} parent=87 // pred_fallthru
        _
    $region88: #{tpu_custom_call.1} parent=5 // pred_fallthru
      _
    %p534 = scmp.le.s32.totalorder 1, %s25
    %p535 = scmp.lt.s32.totalorder %s25, 3
    %p536 = pnand %p534, %p535
    %p537 = pneg %p536
    // Predicated region
    $region93: #{tpu_custom_call.1} parent=5 // pred_check
      _
    $region94: #{tpu_custom_call.1} parent=5 // pred_check_branch
      %539 = sbr.rel (%p536) target = $region96
    $region95: #{tpu_custom_call.1} parent=5 // pred_region
      %s540 = ssub.s32 %s25, 1
      %p541 = scmp.lt.s32.totalorder %s30, 1
      %s542 = scalar_select %p541, %s30, 1
      %s543 = scalar_lea.vmem %s0, %s542
      %p544 = pneg %p51
      %p545 = pneg %p48
      %p546 = pneg %p72
      %p547 = pneg %p69
      %p548 = pneg %p93
      %p549 = pneg %p90
      %p550 = pneg %p114
      %p551 = pneg %p111
      %p552 = pneg %p135
      %p553 = pneg %p132
      %p554 = pneg %p156
      %p555 = pneg %p153
      %p556 = pneg %p177
      %p557 = pneg %p174
      %p558 = pneg %p198
      %p559 = pneg %p195
      %p560 = pneg %p219
      %p561 = pneg %p216
      %p562 = pneg %p240
      %p563 = pneg %p237
      %p564 = pneg %p261
      %p565 = pneg %p258
      %p566 = pneg %p282
      %p567 = pneg %p279
      %p568 = pneg %p303
      %p569 = pneg %p300
      %p570 = pneg %p324
      %p571 = pneg %p321
      %p572 = pneg %p345
      %p573 = pneg %p342
      %p574 = pneg %p366
      %p575 = pneg %p363
      %p576 = pneg %p387
      %p577 = pneg %p384
      %p578 = pneg %p408
      %p579 = pneg %p405
      %p580 = pneg %p429
      %p581 = pneg %p426
      %p582 = pneg %p455
      %p583 = pneg %p452
      %p584 = scmp.lt.s32.totalorder %s30, 1
      %s585 = scalar_select %p584, %s30, 1
      %s586 = smul.addr %s585, 2
      %s587 = smul.addr %s586, 8
      %s588 = scalar_lea.vmem %s19, %s587
      %p589 = scmp.lt.s32.totalorder %s30, 1
      %s590 = scalar_select %p589, %s30, 1
      %s591 = scalar_lea.vmem %s0, %s590
      %p592 = scmp.lt.s32.totalorder %s30, 1
      %s593 = scalar_select %p592, %s30, 1
      %s594 = smul.addr %s593, 2
      %s595 = smul.addr %s594, 8
      %s596 = scalar_lea.vmem %s19, %s595
      %v597 = vld [vmem:[%s591] sm:$0x1]
      %v598 = vld [vmem:[%s1] sm:$0xff]
      %600 = vrot.lane.b32.xlu0 %v598, 127
      %v601 = vpop.permute.xlu0 %600
      %v603 = vperm.slane %v597, 0
      %604 = vrot.lane.b32.xlu0 %v603, 127
      %v605 = vpop.permute.xlu0 %604
      %vm606 = vcmask 7168
      %v607 = vsel %vm606, %v601, 0
      %vm609 = vcmask 1040384
      %v610 = vsel %vm609, %v605, 0
      %612 = vmatpush.msra.mxu0 0.0
      %613 = vmatpush.msra.mxu0 0.0
      %614 = vmatpush.msra.mxu0 0.0
      %615 = vmatpush.msra.mxu0 0.0
      %616 = vmatpush.msra.mxu0 0.0
      %617 = vmatpush.msra.mxu0 0.0
      %618 = vmatpush.msra.mxu0 0.0
      %619 = vmatpush.msra.mxu0 0.0
      %620 = vmatpush.msra.mxu0 0.0
      %621 = vmatpush.msra.mxu0 0.0
      %622 = vmatpush.msra.mxu0 0.0
      %623 = vmatpush.msra.mxu0 0.0
      %624 = vmatpush.msra.mxu0 0.0
      %625 = vmatpush.msra.mxu0 0.0
      %626 = vmatpush.msra.mxu0 0.0
      %627 = vmatpush.msra.mxu0 %v610
      %628 = vmatmul.f32.gmra.mxu0 %v607
      %v629 = vpop.f32.mrf.mxu0
      %v630 = vadd.f32 0.0, %v629
      %631 = vdwg.mxu0
      %v632 = vsel %vm606, %v598, 0
      %v634 = vsel %vm609, %v597, 0
      %636 = vmatpush.msra.mxu0 0.0
      %637 = vmatpush.msra.mxu0 0.0
      %638 = vmatpush.msra.mxu0 0.0
      %639 = vmatpush.msra.mxu0 0.0
      %640 = vmatpush.msra.mxu0 0.0
      %641 = vmatpush.msra.mxu0 0.0
      %642 = vmatpush.msra.mxu0 0.0
      %643 = vmatpush.msra.mxu0 0.0
      %644 = vmatpush.msra.mxu0 0.0
      %645 = vmatpush.msra.mxu0 0.0
      %646 = vmatpush.msra.mxu0 0.0
      %647 = vmatpush.msra.mxu0 0.0
      %648 = vmatpush.msra.mxu0 0.0
      %649 = vmatpush.msra.mxu0 0.0
      %650 = vmatpush.msra.mxu0 0.0
      %651 = vmatpush.msra.mxu0 %v634
      %652 = vmatmul.f32.gmra.mxu0 %v632
      %v653 = vpop.f32.mrf.mxu0
      %v654 = vadd.f32 %v630, %v653
      %655 = vdwg.mxu0
      %656 = vrot.lane.b32.xlu0 %v598, 126
      %v657 = vpop.permute.xlu0 %656
      %658 = vrot.lane.b32.xlu0 %v603, 126
      %v659 = vpop.permute.xlu0 %658
      %v660 = vsel %vm606, %v657, 0
      %v662 = vsel %vm609, %v659, 0
      %664 = vmatpush.msra.mxu0 0.0
      %665 = vmatpush.msra.mxu0 0.0
      %666 = vmatpush.msra.mxu0 0.0
      %667 = vmatpush.msra.mxu0 0.0
      %668 = vmatpush.msra.mxu0 0.0
      %669 = vmatpush.msra.mxu0 0.0
      %670 = vmatpush.msra.mxu0 0.0
      %671 = vmatpush.msra.mxu0 0.0
      %672 = vmatpush.msra.mxu0 0.0
      %673 = vmatpush.msra.mxu0 0.0
      %674 = vmatpush.msra.mxu0 0.0
      %675 = vmatpush.msra.mxu0 0.0
      %676 = vmatpush.msra.mxu0 0.0
      %677 = vmatpush.msra.mxu0 0.0
      %678 = vmatpush.msra.mxu0 0.0
      %679 = vmatpush.msra.mxu0 %v662
      %680 = vmatmul.f32.gmra.mxu0 %v660
      %v681 = vpop.f32.mrf.mxu0
      %v682 = vadd.f32 0.0, %v681
      %683 = vdwg.mxu0
      %v684 = vadd.f32 %v654, %v682
      %v685 = vld [vmem:[%s2] sm:$0xff]
      %687 = vset.pattern.permute.xlu0 0
      %688 = vperm.xlu0 %687, %v685
      %v689 = vpop.permute.xlu0 %688
      %v691 = vadd.f32 %v684, %v689
      %v692 = vld [vmem:[%s3] sm:$0xff]
      %694 = vset.pattern.permute.xlu0 0
      %695 = vperm.xlu0 %694, %v692
      %v696 = vpop.permute.xlu0 %695
      %v698 = vmax.f32 %v691, %v696
      %700 = vrot.lane.b32.xlu0 %v698, 127
      %v701 = vpop.permute.xlu0 %700
      %v703 = vmax.f32 %v698, %v701
      %vm704 = vcmask 515072
      %v705 = vsel %vm704, %v703, 0.0
      %v706 = vld [vmem:[%s13] sm:$0xff]
      %v707 = vld [vmem:[%s13 + $0x8] sm:$0xff]
      %v708 = vld [vmem:[%s13 + $0x10] sm:$0xff]
      %v709 = vld [vmem:[%s13 + $0x18] sm:$0xff]
      %v710 = vld [vmem:[%s13 + $0x20] sm:$0xff]
      %v711 = vld [vmem:[%s13 + $0x28] sm:$0xff]
      %v712 = vld [vmem:[%s13 + $0x30] sm:$0xff]
      %v713 = vld [vmem:[%s13 + $0x38] sm:$0xff]
      %v714 = vld [vmem:[%s13 + $0x40] sm:$0x3]
      %vm715 = vcmask 539648
      %v717 = vsel %vm715, %v705, 0
      %vm719 = vcmask 1041408
      %v721 = vsel %vm719, %v714, 0
      %723 = vmatpush.msra.mxu0 0.0
      %724 = vmatpush.msra.mxu0 0.0
      %725 = vmatpush.msra.mxu0 0.0
      %726 = vmatpush.msra.mxu0 0.0
      %727 = vmatpush.msra.mxu0 0.0
      %728 = vmatpush.msra.mxu0 0.0
      %729 = vmatpush.msra.mxu0 0.0
      %730 = vmatpush.msra.mxu0 %v721
      %731 = vmatpush.msra.mxu0 %v713
      %732 = vmatpush.msra.mxu0 %v712
      %733 = vmatpush.msra.mxu0 %v711
      %734 = vmatpush.msra.mxu0 %v710
      %735 = vmatpush.msra.mxu0 %v709
      %736 = vmatpush.msra.mxu0 %v708
      %737 = vmatpush.msra.mxu0 %v707
      %738 = vmatpush.msra.mxu0 %v706
      %739 = vmatmul.f32.gmra.mxu0 %v717
      %v740 = vpop.f32.mrf.mxu0
      %v741 = vadd.f32 0.0, %v740
      %742 = vdwg.mxu0
      %v743 = vld [vmem:[%s4] sm:$0xff]
      %v744 = vld [vmem:[%s4 + $0x8] sm:$0xff]
      %746 = vrot.lane.b32.xlu0 %v741, 127
      %v747 = vpop.permute.xlu0 %746
      %749 = vrot.lane.b32.xlu0 %v741, 126
      %v750 = vpop.permute.xlu0 %749
      %v752 = vld [vmem:[%s5] sm:$0xff]
      %v753 = vld [vmem:[%s5 + $0x8] sm:$0xff]
      %755 = vset.pattern.permute.xlu0 0
      %756 = vperm.xlu0 %755, %v752
      %v757 = vpop.permute.xlu0 %756
      %760 = vset.pattern.permute.xlu0 0
      %761 = vperm.xlu0 %760, %v753
      %v762 = vpop.permute.xlu0 %761
      %vm764 = vcmask 195584
      %v766 = vsel %vm764, %v743, 0
      %v769 = vsel %vm764, %v744, 0
      %771 = vmatpush.msra.mxu0 0.0
      %772 = vmatpush.msra.mxu0 0.0
      %773 = vmatpush.msra.mxu0 0.0
      %774 = vmatpush.msra.mxu0 0.0
      %775 = vmatpush.msra.mxu0 0.0
      %776 = vmatpush.msra.mxu0 0.0
      %777 = vmatpush.msra.mxu0 0.0
      %778 = vmatpush.msra.mxu0 0.0
      %779 = vmatpush.msra.mxu0 0.0
      %780 = vmatpush.msra.mxu0 0.0
      %781 = vmatpush.msra.mxu0 0.0
      %782 = vmatpush.msra.mxu0 0.0
      %783 = vmatpush.msra.mxu0 0.0
      %784 = vmatpush.msra.mxu0 %v750
      %785 = vmatpush.msra.mxu0 %v747
      %786 = vmatpush.msra.mxu0 %v741
      %787 = vmatmul.f32.gmra.mxu0 %v766
      %v788 = vpop.f32.mrf.mxu0
      %v789 = vadd.f32 %v757, %v788
      %790 = vmatmul.f32.gmra.mxu0 %v769
      %v791 = vpop.f32.mrf.mxu0
      %v792 = vadd.f32 %v762, %v791
      %793 = vdwg.mxu0
      %v794 = vld [vmem:[%s6] sm:$0xff]
      %v795 = vld [vmem:[%s6 + $0x8] sm:$0xff]
      %797 = vset.pattern.permute.xlu0 0
      %798 = vperm.xlu0 %797, %v794
      %v799 = vpop.permute.xlu0 %798
      %802 = vset.pattern.permute.xlu0 0
      %803 = vperm.xlu0 %802, %v795
      %v804 = vpop.permute.xlu0 %803
      %v806 = vmax.f32 %v789, %v799
      %v807 = vmax.f32 %v792, %v804
      %810 = vrot.lane.b32.xlu0 %v806, 127
      %v811 = vpop.permute.xlu0 %810
      %812 = vrot.lane.b32.xlu0 %v807, 127
      %v813 = vpop.permute.xlu0 %812
      %v816 = vmax.f32 %v806, %v811
      %v817 = vmax.f32 %v807, %v813
      %vm818 = vcmask 252928
      %v819 = vsel %vm818, %v816, 0.0
      %v820 = vsel %vm818, %v817, 0.0
      %v821 = vld [vmem:[%s14] sm:$0xff]
      %v822 = vld [vmem:[%s14 + $0x8] sm:$0xff]
      %v823 = vld [vmem:[%s14 + $0x10] sm:$0xff]
      %v824 = vld [vmem:[%s14 + $0x18] sm:$0xff]
      %v825 = vld [vmem:[%s14 + $0x20] sm:$0x3]
      %vm826 = vcmask 277504
      %v828 = vsel %vm826, %v819, 0
      %v831 = vsel %vm826, %v820, 0
      %v834 = vsel %vm719, %v825, 0
      %836 = vmatpush.msra.mxu0 0.0
      %837 = vmatpush.msra.mxu0 0.0
      %838 = vmatpush.msra.mxu0 0.0
      %839 = vmatpush.msra.mxu0 0.0
      %840 = vmatpush.msra.mxu0 0.0
      %841 = vmatpush.msra.mxu0 0.0
      %842 = vmatpush.msra.mxu0 0.0
      %843 = vmatpush.msra.mxu0 0.0
      %844 = vmatpush.msra.mxu0 0.0
      %845 = vmatpush.msra.mxu0 0.0
      %846 = vmatpush.msra.mxu0 0.0
      %847 = vmatpush.msra.mxu0 %v834
      %848 = vmatpush.msra.mxu0 %v824
      %849 = vmatpush.msra.mxu0 %v823
      %850 = vmatpush.msra.mxu0 %v822
      %851 = vmatpush.msra.mxu0 %v821
      %852 = vmatmul.f32.gmra.mxu0 %v828
      %v853 = vpop.f32.mrf.mxu0
      %v854 = vadd.f32 0.0, %v853
      %855 = vmatmul.f32.gmra.mxu0 %v831
      %v856 = vpop.f32.mrf.mxu0
      %v857 = vadd.f32 0.0, %v856
      %858 = vdwg.mxu0
      %v859 = vld [vmem:[%s7] sm:$0xff]
      %v860 = vld [vmem:[%s7 + $0x8] sm:$0xff]
      %v861 = vld [vmem:[%s7 + $0x10] sm:$0xff]
      %v862 = vld [vmem:[%s7 + $0x18] sm:$0xff]
      %865 = vrot.lane.b32.xlu0 %v854, 127
      %v866 = vpop.permute.xlu0 %865
      %867 = vrot.lane.b32.xlu0 %v857, 127
      %v868 = vpop.permute.xlu0 %867
      %871 = vrot.lane.b32.xlu0 %v854, 126
      %v872 = vpop.permute.xlu0 %871
      %873 = vrot.lane.b32.xlu0 %v857, 126
      %v874 = vpop.permute.xlu0 %873
      %v877 = vld [vmem:[%s8] sm:$0xff]
      %v878 = vld [vmem:[%s8 + $0x8] sm:$0xff]
      %v879 = vld [vmem:[%s8 + $0x10] sm:$0xff]
      %v880 = vld [vmem:[%s8 + $0x18] sm:$0xff]
      %882 = vset.pattern.permute.xlu0 0
      %883 = vperm.xlu0 %882, %v877
      %v884 = vpop.permute.xlu0 %883
      %887 = vset.pattern.permute.xlu0 0
      %888 = vperm.xlu0 %887, %v878
      %v889 = vpop.permute.xlu0 %888
      %892 = vset.pattern.permute.xlu0 0
      %893 = vperm.xlu0 %892, %v879
      %v894 = vpop.permute.xlu0 %893
      %897 = vset.pattern.permute.xlu0 0
      %898 = vperm.xlu0 %897, %v880
      %v899 = vpop.permute.xlu0 %898
      %vm901 = vcmask 392192
      %v903 = vsel %vm901, %v859, 0
      %v906 = vsel %vm901, %v860, 0
      %v909 = vsel %vm901, %v861, 0
      %v912 = vsel %vm901, %v862, 0
      %914 = vmatpush.msra.mxu0 0.0
      %915 = vmatpush.msra.mxu0 0.0
      %916 = vmatpush.msra.mxu0 0.0
      %917 = vmatpush.msra.mxu0 0.0
      %918 = vmatpush.msra.mxu0 0.0
      %919 = vmatpush.msra.mxu0 0.0
      %920 = vmatpush.msra.mxu0 0.0
      %921 = vmatpush.msra.mxu0 0.0
      %922 = vmatpush.msra.mxu0 0.0
      %923 = vmatpush.msra.mxu0 0.0
      %924 = vmatpush.msra.mxu0 %v874
      %925 = vmatpush.msra.mxu0 %v872
      %926 = vmatpush.msra.mxu0 %v868
      %927 = vmatpush.msra.mxu0 %v866
      %928 = vmatpush.msra.mxu0 %v857
      %929 = vmatpush.msra.mxu0 %v854
      %930 = vmatmul.f32.gmra.mxu0 %v903
      %v931 = vpop.f32.mrf.mxu0
      %v932 = vadd.f32 %v884, %v931
      %933 = vmatmul.f32.gmra.mxu0 %v906
      %v934 = vpop.f32.mrf.mxu0
      %v935 = vadd.f32 %v889, %v934
      %936 = vmatmul.f32.gmra.mxu0 %v909
      %v937 = vpop.f32.mrf.mxu0
      %v938 = vadd.f32 %v894, %v937
      %939 = vmatmul.f32.gmra.mxu0 %v912
      %v940 = vpop.f32.mrf.mxu0
      %v941 = vadd.f32 %v899, %v940
      %942 = vdwg.mxu0
      %v943 = vld [vmem:[%s9] sm:$0xff]
      %v944 = vld [vmem:[%s9 + $0x8] sm:$0xff]
      %v945 = vld [vmem:[%s9 + $0x10] sm:$0xff]
      %v946 = vld [vmem:[%s9 + $0x18] sm:$0xff]
      %948 = vset.pattern.permute.xlu0 0
      %949 = vperm.xlu0 %948, %v943
      %v950 = vpop.permute.xlu0 %949
      %953 = vset.pattern.permute.xlu0 0
      %954 = vperm.xlu0 %953, %v944
      %v955 = vpop.permute.xlu0 %954
      %958 = vset.pattern.permute.xlu0 0
      %959 = vperm.xlu0 %958, %v945
      %v960 = vpop.permute.xlu0 %959
      %963 = vset.pattern.permute.xlu0 0
      %964 = vperm.xlu0 %963, %v946
      %v965 = vpop.permute.xlu0 %964
      %v967 = vmax.f32 %v932, %v950
      %v968 = vmax.f32 %v935, %v955
      %v969 = vmax.f32 %v938, %v960
      %v970 = vmax.f32 %v941, %v965
      %975 = vrot.lane.b32.xlu0 %v967, 127
      %v976 = vpop.permute.xlu0 %975
      %977 = vrot.lane.b32.xlu0 %v968, 127
      %v978 = vpop.permute.xlu0 %977
      %979 = vrot.lane.b32.xlu0 %v969, 127
      %v980 = vpop.permute.xlu0 %979
      %981 = vrot.lane.b32.xlu0 %v970, 127
      %v982 = vpop.permute.xlu0 %981
      %v987 = vmax.f32 %v967, %v976
      %v988 = vmax.f32 %v968, %v978
      %v989 = vmax.f32 %v969, %v980
      %v990 = vmax.f32 %v970, %v982
      %vm991 = vcmask 121856
      %v992 = vsel %vm991, %v987, 0.0
      %v993 = vsel %vm991, %v988, 0.0
      %v994 = vsel %vm991, %v989, 0.0
      %v995 = vsel %vm991, %v990, 0.0
      %v996 = vld [vmem:[%s15] sm:$0xff]
      %v997 = vld [vmem:[%s15 + $0x8] sm:$0xff]
      %v998 = vld [vmem:[%s15 + $0x10] sm:$0x3]
      %vm999 = vcmask 146432
      %v1001 = vsel %vm999, %v992, 0
      %v1004 = vsel %vm999, %v993, 0
      %v1007 = vsel %vm999, %v994, 0
      %v1010 = vsel %vm999, %v995, 0
      %v1013 = vsel %vm719, %v998, 0
      %1015 = vmatpush.msra.mxu0 0.0
      %1016 = vmatpush.msra.mxu0 0.0
      %1017 = vmatpush.msra.mxu0 0.0
      %1018 = vmatpush.msra.mxu0 0.0
      %1019 = vmatpush.msra.mxu0 0.0
      %1020 = vmatpush.msra.mxu0 0.0
      %1021 = vmatpush.msra.mxu0 0.0
      %1022 = vmatpush.msra.mxu0 0.0
      %1023 = vmatpush.msra.mxu0 0.0
      %1024 = vmatpush.msra.mxu0 0.0
      %1025 = vmatpush.msra.mxu0 0.0
      %1026 = vmatpush.msra.mxu0 0.0
      %1027 = vmatpush.msra.mxu0 0.0
      %1028 = vmatpush.msra.mxu0 %v1013
      %1029 = vmatpush.msra.mxu0 %v997
      %1030 = vmatpush.msra.mxu0 %v996
      %1031 = vmatmul.f32.gmra.mxu0 %v1001
      %v1032 = vpop.f32.mrf.mxu0
      %v1033 = vadd.f32 0.0, %v1032
      %1034 = vmatmul.f32.gmra.mxu0 %v1004
      %v1035 = vpop.f32.mrf.mxu0
      %v1036 = vadd.f32 0.0, %v1035
      %1037 = vmatmul.f32.gmra.mxu0 %v1007
      %v1038 = vpop.f32.mrf.mxu0
      %v1039 = vadd.f32 0.0, %v1038
      %1040 = vmatmul.f32.gmra.mxu0 %v1010
      %v1041 = vpop.f32.mrf.mxu0
      %v1042 = vadd.f32 0.0, %v1041
      %1043 = vdwg.mxu0
      %v1044 = vld [vmem:[%s10] sm:$0xff]
      %v1045 = vld [vmem:[%s10 + $0x8] sm:$0xff]
      %v1046 = vld [vmem:[%s10 + $0x10] sm:$0xff]
      %v1047 = vld [vmem:[%s10 + $0x18] sm:$0xff]
      %1052 = vrot.lane.b32.xlu0 %v1033, 127
      %v1053 = vpop.permute.xlu0 %1052
      %1054 = vrot.lane.b32.xlu0 %v1036, 127
      %v1055 = vpop.permute.xlu0 %1054
      %1056 = vrot.lane.b32.xlu0 %v1039, 127
      %v1057 = vpop.permute.xlu0 %1056
      %1058 = vrot.lane.b32.xlu0 %v1042, 127
      %v1059 = vpop.permute.xlu0 %1058
      %1064 = vrot.lane.b32.xlu0 %v1033, 126
      %v1065 = vpop.permute.xlu0 %1064
      %1066 = vrot.lane.b32.xlu0 %v1036, 126
      %v1067 = vpop.permute.xlu0 %1066
      %1068 = vrot.lane.b32.xlu0 %v1039, 126
      %v1069 = vpop.permute.xlu0 %1068
      %1070 = vrot.lane.b32.xlu0 %v1042, 126
      %v1071 = vpop.permute.xlu0 %1070
      %v1076 = vld [vmem:[%s11] sm:$0xff]
      %v1077 = vld [vmem:[%s11 + $0x8] sm:$0xff]
      %v1078 = vld [vmem:[%s11 + $0x10] sm:$0xff]
      %v1079 = vld [vmem:[%s11 + $0x18] sm:$0xff]
      %1081 = vset.pattern.permute.xlu0 0
      %1082 = vperm.xlu0 %1081, %v1076
      %v1083 = vpop.permute.xlu0 %1082
      %1086 = vset.pattern.permute.xlu0 0
      %1087 = vperm.xlu0 %1086, %v1077
      %v1088 = vpop.permute.xlu0 %1087
      %1091 = vset.pattern.permute.xlu0 0
      %1092 = vperm.xlu0 %1091, %v1078
      %v1093 = vpop.permute.xlu0 %1092
      %1096 = vset.pattern.permute.xlu0 0
      %1097 = vperm.xlu0 %1096, %v1079
      %v1098 = vpop.permute.xlu0 %1097
      %vm1100 = vcmask 785408
      %v1102 = vsel %vm1100, %v1044, 0
      %v1105 = vsel %vm1100, %v1045, 0
      %v1108 = vsel %vm1100, %v1046, 0
      %v1111 = vsel %vm1100, %v1047, 0
      %1113 = vmatpush.msra.mxu0 0.0
      %1114 = vmatpush.msra.mxu0 0.0
      %1115 = vmatpush.msra.mxu0 0.0
      %1116 = vmatpush.msra.mxu0 0.0
      %1117 = vmatpush.msra.mxu0 %v1071
      %1118 = vmatpush.msra.mxu0 %v1069
      %1119 = vmatpush.msra.mxu0 %v1067
      %1120 = vmatpush.msra.mxu0 %v1065
      %1121 = vmatpush.msra.mxu0 %v1059
      %1122 = vmatpush.msra.mxu0 %v1057
      %1123 = vmatpush.msra.mxu0 %v1055
      %1124 = vmatpush.msra.mxu0 %v1053
      %1125 = vmatpush.msra.mxu0 %v1042
      %1126 = vmatpush.msra.mxu0 %v1039
      %1127 = vmatpush.msra.mxu0 %v1036
      %1128 = vmatpush.msra.mxu0 %v1033
      %1129 = vmatmul.f32.gmra.mxu0 %v1102
      %v1130 = vpop.f32.mrf.mxu0
      %v1131 = vadd.f32 %v1083, %v1130
      %1132 = vmatmul.f32.gmra.mxu0 %v1105
      %v1133 = vpop.f32.mrf.mxu0
      %v1134 = vadd.f32 %v1088, %v1133
      %1135 = vmatmul.f32.gmra.mxu0 %v1108
      %v1136 = vpop.f32.mrf.mxu0
      %v1137 = vadd.f32 %v1093, %v1136
      %1138 = vmatmul.f32.gmra.mxu0 %v1111
      %v1139 = vpop.f32.mrf.mxu0
      %v1140 = vadd.f32 %v1098, %v1139
      %1141 = vdwg.mxu0
      %v1142 = vld [vmem:[%s12] sm:$0xff]
      %v1143 = vld [vmem:[%s12 + $0x8] sm:$0xff]
      %v1144 = vld [vmem:[%s12 + $0x10] sm:$0xff]
      %v1145 = vld [vmem:[%s12 + $0x18] sm:$0xff]
      %1147 = vset.pattern.permute.xlu0 0
      %1148 = vperm.xlu0 %1147, %v1142
      %v1149 = vpop.permute.xlu0 %1148
      %1152 = vset.pattern.permute.xlu0 0
      %1153 = vperm.xlu0 %1152, %v1143
      %v1154 = vpop.permute.xlu0 %1153
      %1157 = vset.pattern.permute.xlu0 0
      %1158 = vperm.xlu0 %1157, %v1144
      %v1159 = vpop.permute.xlu0 %1158
      %1162 = vset.pattern.permute.xlu0 0
      %1163 = vperm.xlu0 %1162, %v1145
      %v1164 = vpop.permute.xlu0 %1163
      %v1166 = vmax.f32 %v1131, %v1149
      %v1167 = vmax.f32 %v1134, %v1154
      %v1168 = vmax.f32 %v1137, %v1159
      %v1169 = vmax.f32 %v1140, %v1164
      %1174 = vrot.lane.b32.xlu0 %v1166, 127
      %v1175 = vpop.permute.xlu0 %1174
      %1176 = vrot.lane.b32.xlu0 %v1167, 127
      %v1177 = vpop.permute.xlu0 %1176
      %1178 = vrot.lane.b32.xlu0 %v1168, 127
      %v1179 = vpop.permute.xlu0 %1178
      %1180 = vrot.lane.b32.xlu0 %v1169, 127
      %v1181 = vpop.permute.xlu0 %1180
      %v1186 = vmax.f32 %v1166, %v1175
      %v1187 = vmax.f32 %v1167, %v1177
      %v1188 = vmax.f32 %v1168, %v1179
      %v1189 = vmax.f32 %v1169, %v1181
      %vm1190 = vcmask 56320
      %v1191 = vsel %vm1190, %v1186, 0.0
      %v1192 = vsel %vm1190, %v1187, 0.0
      %v1193 = vsel %vm1190, %v1188, 0.0
      %v1194 = vsel %vm1190, %v1189, 0.0
      %v1195 = vld [vmem:[%s16] sm:$0xff]
      %v1196 = vld [vmem:[%s16 + $0x8] sm:$0x3]
      %vm1197 = vcmask 80896
      %v1199 = vsel %vm1197, %v1191, 0
      %v1202 = vsel %vm1197, %v1192, 0
      %v1205 = vsel %vm1197, %v1193, 0
      %v1208 = vsel %vm1197, %v1194, 0
      %v1211 = vsel %vm719, %v1196, 0
      %1213 = vmatpush.msra.mxu0 0.0
      %1214 = vmatpush.msra.mxu0 0.0
      %1215 = vmatpush.msra.mxu0 0.0
      %1216 = vmatpush.msra.mxu0 0.0
      %1217 = vmatpush.msra.mxu0 0.0
      %1218 = vmatpush.msra.mxu0 0.0
      %1219 = vmatpush.msra.mxu0 0.0
      %1220 = vmatpush.msra.mxu0 0.0
      %1221 = vmatpush.msra.mxu0 0.0
      %1222 = vmatpush.msra.mxu0 0.0
      %1223 = vmatpush.msra.mxu0 0.0
      %1224 = vmatpush.msra.mxu0 0.0
      %1225 = vmatpush.msra.mxu0 0.0
      %1226 = vmatpush.msra.mxu0 0.0
      %1227 = vmatpush.msra.mxu0 %v1211
      %1228 = vmatpush.msra.mxu0 %v1195
      %1229 = vmatmul.f32.gmra.mxu0 %v1199
      %v1230 = vpop.f32.mrf.mxu0
      %v1231 = vadd.f32 0.0, %v1230
      %1232 = vmatmul.f32.gmra.mxu0 %v1202
      %v1233 = vpop.f32.mrf.mxu0
      %v1234 = vadd.f32 0.0, %v1233
      %1235 = vmatmul.f32.gmra.mxu0 %v1205
      %v1236 = vpop.f32.mrf.mxu0
      %v1237 = vadd.f32 0.0, %v1236
      %1238 = vmatmul.f32.gmra.mxu0 %v1208
      %v1239 = vpop.f32.mrf.mxu0
      %v1240 = vadd.f32 0.0, %v1239
      %1241 = vdwg.mxu0
      %1246 = vrot.lane.b32.xlu0 %v1231, 127
      %v1247 = vpop.permute.xlu0 %1246
      %1248 = vrot.lane.b32.xlu0 %v1234, 127
      %v1249 = vpop.permute.xlu0 %1248
      %1250 = vrot.lane.b32.xlu0 %v1237, 127
      %v1251 = vpop.permute.xlu0 %1250
      %1252 = vrot.lane.b32.xlu0 %v1240, 127
      %v1253 = vpop.permute.xlu0 %1252
      %1258 = vrot.lane.b32.xlu0 %v1231, 126
      %v1259 = vpop.permute.xlu0 %1258
      %1260 = vrot.lane.b32.xlu0 %v1234, 126
      %v1261 = vpop.permute.xlu0 %1260
      %1262 = vrot.lane.b32.xlu0 %v1237, 126
      %v1263 = vpop.permute.xlu0 %1262
      %1264 = vrot.lane.b32.xlu0 %v1240, 126
      %v1265 = vpop.permute.xlu0 %1264
      %1270 = vrot.lane.b32.xlu0 %v1231, 125
      %v1271 = vpop.permute.xlu0 %1270
      %1272 = vrot.lane.b32.xlu0 %v1234, 125
      %v1273 = vpop.permute.xlu0 %1272
      %1274 = vrot.lane.b32.xlu0 %v1237, 125
      %v1275 = vpop.permute.xlu0 %1274
      %1276 = vrot.lane.b32.xlu0 %v1240, 125
      %v1277 = vpop.permute.xlu0 %1276
      %v1282 = vld [vmem:[%s17] sm:$0xff]
      %v1283 = vld [vmem:[%s17 + $0x8] sm:$0x3]
      %v1284 = vld [vmem:[%s18] sm:$0xff]
      %v1285 = vld [vmem:[%s18 + $0x8] sm:$0x3]
      %1286 = vmatpush.msra.mxu0 %v1277
      %1287 = vmatpush.msra.mxu0 %v1275
      %1288 = vmatpush.msra.mxu0 %v1273
      %1289 = vmatpush.msra.mxu0 %v1271
      %1290 = vmatpush.msra.mxu0 %v1265
      %1291 = vmatpush.msra.mxu0 %v1263
      %1292 = vmatpush.msra.mxu0 %v1261
      %1293 = vmatpush.msra.mxu0 %v1259
      %1294 = vmatpush.msra.mxu0 %v1253
      %1295 = vmatpush.msra.mxu0 %v1251
      %1296 = vmatpush.msra.mxu0 %v1249
      %1297 = vmatpush.msra.mxu0 %v1247
      %1298 = vmatpush.msra.mxu0 %v1240
      %1299 = vmatpush.msra.mxu0 %v1237
      %1300 = vmatpush.msra.mxu0 %v1234
      %1301 = vmatpush.msra.mxu0 %v1231
      %1302 = vmatmul.f32.gmra.mxu0 %v1282
      %v1303 = vpop.f32.mrf.mxu0
      %v1304 = vadd.f32 %v1284, %v1303
      %1305 = vmatmul.f32.gmra.mxu0 %v1283
      %v1306 = vpop.f32.mrf.mxu0
      %v1307 = vadd.f32 %v1285, %v1306
      %1308 = vdwg.mxu0
      %1309 = vst.msk [vmem:[%s596] sm:$0xff] %vm606, %v1304
      %vm1310 = vcmask 1024
      %1311 = vst.msk [vmem:[%s596 + $0x8] sm:$0x3] %vm1310, %v1307
      %p1312 = scmp.lt.s32.totalorder %s30, 1
      %s1313 = scalar_select %p1312, %s30, 1
      %s1314 = smul.addr %s1313, 2
      %s1315 = smul.addr %s1314, 8
      %s1316 = scalar_lea.vmem %s19, %s1315
      // Predicated region
      $region97: #{tpu_custom_call.1} parent=95 // pred_check
        %p1317 = pneg %p452
      $region98: #{tpu_custom_call.1} parent=95 // pred_check_branch
        %1319 = sbr.rel (%p1317) target = $region100
      $region99: #{tpu_custom_call.1} parent=95 // pred_region
        _
      $region100: #{tpu_custom_call.1} parent=95 // pred_fallthru
        _
    $region96: #{tpu_custom_call.1} parent=5 // pred_fallthru
      _
    %p1320 = scmp.le.s32.totalorder 2, %s25
    // Predicated region
    $region101: #{tpu_custom_call.1} parent=5 // pred_check
      %p1321 = pneg %p1320
    $region102: #{tpu_custom_call.1} parent=5 // pred_check_branch
      %1323 = sbr.rel (%p1321) target = $region104
    $region103: #{tpu_custom_call.1} parent=5 // pred_region
      %s1324 = ssub.s32 %s25, 2
      // Predicated region
      $region105: #{tpu_custom_call.1} parent=103 // pred_check
        %p1325 = pneg %p458
      $region106: #{tpu_custom_call.1} parent=103 // pred_check_branch
        %1327 = sbr.rel (%p1325) target = $region108
      $region107: #{tpu_custom_call.1} parent=103 // pred_region
        %p1328 = scmp.lt.s32.totalorder %s31, 1
        %s1329 = scalar_select %p1328, %s31, 1
        %s1330 = smul.addr %s1329, 2
        %s1331 = smul.addr %s1330, 8
        %s1332 = scalar_lea.vmem %s19, %s1331
      $region108: #{tpu_custom_call.1} parent=103 // pred_fallthru
        _
    $region104: #{tpu_custom_call.1} parent=5 // pred_fallthru
      _
  $region6: #{tpu_custom_call.1} parent=0 // loop_footer
    %s29 = sadd.s32 1, %s25
  $region7: #{tpu_custom_call.1} parent=0 // loop_footer_branch
    %24 = sbr.rel target = $region3
  $region8: #{tpu_custom_call.1} parent=0 // loop_exit
    _

</llo_original>
